<compile_context>
chip_gen: v7x
topology: tpu7x:2x2x1
jax: 0.10.0
libtpu: 0.0.40
codegen_flags: <defaults>
</compile_context>

<pallas_src>
import functools

import jax
import jax.numpy as jnp
from jax.experimental import pallas as pl
from jax.experimental.pallas import tpu as pltpu

HIDDEN_DIM = 128  # fixed by the module: nn.Linear(inp + h, 128)


def _rnn_chunk_kernel(
    x_ref,      # (Tc*B, inp)    this chunk's inputs, time-major flattened
    h0_ref,     # (B, h)         initial hidden (resident)
    wx_ref,     # (inp, 128)     input rows of W_inner.T (resident)
    wh_ref,     # (h, 128)       hidden rows of W_inner.T (resident)
    bi_ref,     # (1, 128)       b_inner
    whid_ref,   # (128, h)       W_in2hidden.T (resident)
    bhid_ref,   # (1, h)
    wout_ref,   # (128, out)     W_in2out.T (resident)
    bout_ref,   # (1, out)
    out_ref,    # (Tc*B, out)    per-chunk log_softmax output block
    hfin_ref,   # (B, h)         final hidden (resident; doubles as chunk carry)
    acc_ref,    # (Tc*B, 128)    VMEM scratch: Xproj, overwritten with `inner`
    *,
    t_actual,   # true (unpadded) sequence length
    tc,         # timesteps per chunk
    b_pad,      # padded batch
):
    c = pl.program_id(0)

    # Initialise the recurrent carry from h0 on the first chunk.  hfin_ref has
    # a constant block index, so it stays resident in VMEM across the grid and
    # serves as both the cross-chunk carry and the final-hidden output.
    @pl.when(c == 0)
    def _():
        hfin_ref[...] = h0_ref[...]

    # ---- batched (non-recurrent) input projection for the whole chunk ------
    # One large MXU matmul (M = Tc*B) instead of Tc tiny (M = B) ones.
    acc_ref[...] = (
        jnp.dot(x_ref[...], wx_ref[...], preferred_element_type=jnp.float32)
        + bi_ref[...]
    )

    # Hoist weight / bias reads (and the bias broadcast) out of the loop.
    wh = wh_ref[...]
    whid = whid_ref[...]
    bhid = jnp.broadcast_to(bhid_ref[...], (b_pad, bhid_ref.shape[-1]))

    # ---- serial recurrence: only the truly sequential work stays here -------
    def step(t, h):
        row = pl.multiple_of(t * b_pad, b_pad)          # sublane-aligned start
        xp = acc_ref[pl.ds(row, b_pad), :]              # Xproj[t] + b_inner
        inner_t = jnp.maximum(
            xp + jnp.dot(h, wh, preferred_element_type=jnp.float32), 0.0)
        acc_ref[pl.ds(row, b_pad), :] = inner_t         # stash for the epilogue
        h_new = (
            jnp.dot(inner_t, whid, preferred_element_type=jnp.float32) + bhid
        )
        if t_actual % tc != 0:
            # Time axis was padded: freeze the hidden state on padded steps.
            h_new = jnp.where(c * tc + t < t_actual, h_new, h)
        return h_new

    h_last = jax.lax.fori_loop(0, tc, step, hfin_ref[...], unroll=tc <= 32)
    hfin_ref[...] = h_last                               # carry / final hidden

    # ---- batched epilogue: logits head + log_softmax (off the serial chain) -
    logits = (
        jnp.dot(acc_ref[...], wout_ref[...], preferred_element_type=jnp.float32)
        + bout_ref[...]
    )
    m = jnp.max(logits, axis=-1, keepdims=True)
    z = logits - m
    lse = jnp.log(jnp.sum(jnp.exp(z), axis=-1, keepdims=True))
    out_ref[...] = z - lse


def simple_rnn_sequence(x_seq, hidden0, params, *, max_chunk=128):
    """Run the RNN over a whole sequence in ONE pallas_call.

    x_seq: (T, B, inp), hidden0: (B, h).
    Returns (log_probs: (T, B, out), final_hidden: (B, h)).
    """
    T, B, inp = x_seq.shape
    h = hidden0.shape[1]
    out = params["b_out"].shape[1]

    # Pad batch to a multiple of 8 (sublane granularity); padded rows are
    # finite garbage (bias-only) and are sliced away below.
    B_pad = max(8, ((B + 7) // 8) * 8)
    Tc = min(T, max_chunk)
    num_chunks = -(-T // Tc)
    T_pad = num_chunks * Tc

    if B_pad != B:
        x_seq = jnp.pad(x_seq, ((0, 0), (0, B_pad - B), (0, 0)))
        hidden0 = jnp.pad(hidden0, ((0, B_pad - B), (0, 0)))
    if T_pad != T:
        x_seq = jnp.pad(x_seq, ((0, T_pad - T), (0, 0), (0, 0)))

    # Flatten time-major so the kernel sees a simple 2D (Tc*B, inp) block
    # (no in-kernel reshape needed for the big input-projection matmul).
    x_flat = x_seq.reshape(T_pad * B_pad, inp)

    kernel = functools.partial(
        _rnn_chunk_kernel, t_actual=T, tc=Tc, b_pad=B_pad)

    flops = (
        2 * T_pad * B_pad * inp * HIDDEN_DIM          # input projection
        + 2 * T_pad * B_pad * h * HIDDEN_DIM          # recurrent h @ W_h
        + 2 * T_pad * B_pad * HIDDEN_DIM * h          # hidden head
        + 2 * T_pad * B_pad * HIDDEN_DIM * out        # logits head
    )
    bytes_accessed = 4 * (
        x_flat.size + hidden0.size
        + params["w_x"].size + params["w_hrec"].size + params["b_inner"].size
        + params["w_hid"].size + params["b_hid"].size
        + params["w_out"].size + params["b_out"].size
        + T_pad * B_pad * out + B_pad * h
    )

    out_flat, h_final = pl.pallas_call(
        kernel,
        out_shape=(
            jax.ShapeDtypeStruct((T_pad * B_pad, out), jnp.float32),
            jax.ShapeDtypeStruct((B_pad, h), jnp.float32),
        ),
        grid_spec=pltpu.PrefetchScalarGridSpec(
            num_scalar_prefetch=0,
            grid=(num_chunks,),
            in_specs=[
                pl.BlockSpec((Tc * B_pad, inp), lambda c: (c, 0)),      # x chunk
                pl.BlockSpec((B_pad, h), lambda c: (0, 0)),             # h0
                pl.BlockSpec((inp, HIDDEN_DIM), lambda c: (0, 0)),      # W_x
                pl.BlockSpec((h, HIDDEN_DIM), lambda c: (0, 0)),        # W_hrec
                pl.BlockSpec((1, HIDDEN_DIM), lambda c: (0, 0)),        # b_inner
                pl.BlockSpec((HIDDEN_DIM, h), lambda c: (0, 0)),        # W_hid
                pl.BlockSpec((1, h), lambda c: (0, 0)),                 # b_hid
                pl.BlockSpec((HIDDEN_DIM, out), lambda c: (0, 0)),      # W_out
                pl.BlockSpec((1, out), lambda c: (0, 0)),               # b_out
            ],
            out_specs=(
                pl.BlockSpec((Tc * B_pad, out), lambda c: (c, 0)),      # log_probs
                pl.BlockSpec((B_pad, h), lambda c: (0, 0)),             # final hidden
            ),
            scratch_shapes=[
                pltpu.VMEM((Tc * B_pad, HIDDEN_DIM), jnp.float32),
            ],
        ),
        compiler_params=pltpu.CompilerParams(
            dimension_semantics=("arbitrary",)),   # time recurrence is sequential
        cost_estimate=pl.CostEstimate(
            flops=flops,
            transcendentals=T_pad * B_pad * (out + 1),
            bytes_accessed=bytes_accessed,
        ),
    )(
        x_flat, hidden0,
        params["w_x"], params["w_hrec"], params["b_inner"],
        params["w_hid"], params["b_hid"],
        params["w_out"], params["b_out"],
    )

    out_seq = out_flat.reshape(T_pad, B_pad, out)[:T, :B, :]
    return out_seq, h_final[:B, :]


def simple_rnn_forward(x, hidden, params):
    """Single-step forward, identical to SimpleRNN.forward(x, hidden)."""
    out_seq, h_new = simple_rnn_sequence(x[None], hidden, params)
    return out_seq[0], h_new


def init_params(key, inp_size, h_size, out_size, hidden_dim=HIDDEN_DIM):
    """nn.Linear-style U(-1/sqrt(fan_in), 1/sqrt(fan_in)) init; weights are
    pre-transposed and the inner weight is split into its x / hidden parts so
    the non-recurrent projection can be batched outside the recurrence."""
    ks = jax.random.split(key, 6)

    def lin(kw, kb, fan_in, fan_out):
        bound = fan_in ** -0.5
        w = jax.random.uniform(kw, (fan_out, fan_in), jnp.float32, -bound, bound)
        b = jax.random.uniform(kb, (1, fan_out), jnp.float32, -bound, bound)
        return w, b

    w_inner, b_inner = lin(ks[0], ks[1], inp_size + h_size, hidden_dim)  # (128, inp+h)
    w_h, b_h = lin(ks[2], ks[3], hidden_dim, h_size)                     # (h, 128)
    w_o, b_o = lin(ks[4], ks[5], hidden_dim, out_size)                   # (out, 128)

    return {
        "w_x": jnp.transpose(w_inner[:, :inp_size]),     # (inp, 128)
        "w_hrec": jnp.transpose(w_inner[:, inp_size:]),  # (h, 128)
        "b_inner": b_inner,                              # (1, 128)
        "w_hid": jnp.transpose(w_h),                     # (128, h)
        "b_hid": b_h,                                    # (1, h)
        "w_out": jnp.transpose(w_o),                     # (128, out)
        "b_out": b_o,                                    # (1, out)
    }


def reference_forward(x, hidden, params):
    inner = jnp.maximum(
        x @ params["w_x"] + hidden @ params["w_hrec"] + params["b_inner"], 0.0)
    h_new = inner @ params["w_hid"] + params["b_hid"]
    logits = inner @ params["w_out"] + params["b_out"]
    return jax.nn.log_softmax(logits, axis=1), h_new


def reference_sequence(x_seq, hidden0, params):
    def step(h, x):
        out, h_new = reference_forward(x, h, params)
        return h_new, out

    h_final, outs = jax.lax.scan(step, hidden0, x_seq)
    return outs, h_final


if __name__ == "__main__":
    inp_size, h_size, out_size = 16, 32, 16
    batch, seq_len = 2, 8

    key = jax.random.PRNGKey(0)
    k_x, k_p = jax.random.split(key, 2)

    x_seq = jax.random.normal(k_x, (seq_len, batch, inp_size), jnp.float32)
    hidden0 = jnp.zeros((batch, h_size), jnp.float32)  # matches init_hidden (zeros)
    params = init_params(k_p, inp_size, h_size, out_size)

    # Fused, time-chunked kernel: one pallas_call, resident weights, in-kernel
    # recurrence, batched input projection / logits head / log_softmax.
    out_seq, h_final = simple_rnn_sequence(x_seq, hidden0, params)
    out_seq = jax.block_until_ready(out_seq)
    h_final = jax.block_until_ready(h_final)

    ref_out_seq, ref_h_final = reference_sequence(x_seq, hidden0, params)
    assert jnp.allclose(out_seq, ref_out_seq, atol=1e-5, rtol=1e-5)
    assert jnp.allclose(h_final, ref_h_final, atol=1e-5, rtol=1e-5)

    # Single-step path (exact SimpleRNN.forward semantics).
    out1, h1 = simple_rnn_forward(x_seq[0], hidden0, params)
    out1 = jax.block_until_ready(out1)
    h1 = jax.block_until_ready(h1)
    ref_out1, ref_h1 = reference_forward(x_seq[0], hidden0, params)
    assert jnp.allclose(out1, ref_out1, atol=1e-5, rtol=1e-5)
    assert jnp.allclose(h1, ref_h1, atol=1e-5, rtol=1e-5)

    print("KERNEL_OK")
</pallas_src>

<mosaic_0001>
module attributes {stable_mosaic.version = 11 : i64} {
  func.func @_rnn_chunk_kernel(%arg0: i32, %arg1: memref<64x16xf32, #tpu.memory_space<vmem>>, %arg2: memref<8x32xf32, #tpu.memory_space<vmem>>, %arg3: memref<16x128xf32, #tpu.memory_space<vmem>>, %arg4: memref<32x128xf32, #tpu.memory_space<vmem>>, %arg5: memref<1x128xf32, #tpu.memory_space<vmem>>, %arg6: memref<128x32xf32, #tpu.memory_space<vmem>>, %arg7: memref<1x32xf32, #tpu.memory_space<vmem>>, %arg8: memref<128x16xf32, #tpu.memory_space<vmem>>, %arg9: memref<1x16xf32, #tpu.memory_space<vmem>>, %arg10: memref<64x16xf32, #tpu.memory_space<vmem>>, %arg11: memref<8x32xf32, #tpu.memory_space<vmem>>, %arg12: memref<64x128xf32, #tpu.memory_space<vmem>>) attributes {dimension_semantics = [#tpu.dimension_semantics<arbitrary>], iteration_bounds = array<i64: 1>, scalar_prefetch = 0 : i64, scratch_operands = 1 : i64, tpu.core_type = #tpu.core_type<tc>, window_params = [{transform_indices = @transform_0, window_bounds = array<i64: 64, 16>}, {pipeline_mode = #tpu.pipeline_mode<synchronous>, transform_indices = @transform_1, window_bounds = array<i64: 8, 32>}, {pipeline_mode = #tpu.pipeline_mode<synchronous>, transform_indices = @transform_2, window_bounds = array<i64: 16, 128>}, {pipeline_mode = #tpu.pipeline_mode<synchronous>, transform_indices = @transform_3, window_bounds = array<i64: 32, 128>}, {pipeline_mode = #tpu.pipeline_mode<synchronous>, transform_indices = @transform_4, window_bounds = array<i64: 1, 128>}, {pipeline_mode = #tpu.pipeline_mode<synchronous>, transform_indices = @transform_5, window_bounds = array<i64: 128, 32>}, {pipeline_mode = #tpu.pipeline_mode<synchronous>, transform_indices = @transform_6, window_bounds = array<i64: 1, 32>}, {pipeline_mode = #tpu.pipeline_mode<synchronous>, transform_indices = @transform_7, window_bounds = array<i64: 128, 16>}, {pipeline_mode = #tpu.pipeline_mode<synchronous>, transform_indices = @transform_8, window_bounds = array<i64: 1, 16>}, {transform_indices = @transform_9, window_bounds = array<i64: 64, 16>}, {pipeline_mode = #tpu.pipeline_mode<synchronous>, transform_indices = @transform_10, window_bounds = array<i64: 8, 32>}]} {
    %c0_i32 = arith.constant 0 : i32
    %0 = arith.cmpi eq, %arg0, %c0_i32 : i32
    %1 = arith.extui %0 : i1 to i32
    %c0_i32_0 = arith.constant 0 : i32
    %2 = arith.cmpi ne, %1, %c0_i32_0 : i32
    scf.if %2 {
      %c0_78 = arith.constant 0 : index
      %c0_79 = arith.constant 0 : index
      %130 = vector.load %arg2[%c0_78, %c0_79] : memref<8x32xf32, #tpu.memory_space<vmem>>, vector<8x32xf32>
      %c0_80 = arith.constant 0 : index
      %c0_81 = arith.constant 0 : index
      %131 = vector.load %arg11[%c0_80, %c0_81] : memref<8x32xf32, #tpu.memory_space<vmem>>, vector<8x32xf32>
      tpu.vector_store %arg11[%c0_80, %c0_81], %130 {strides = array<i32>} : memref<8x32xf32, #tpu.memory_space<vmem>>, vector<8x32xf32>,
    } else {
    }
    %c0 = arith.constant 0 : index
    %c0_1 = arith.constant 0 : index
    %3 = vector.load %arg1[%c0, %c0_1] : memref<64x16xf32, #tpu.memory_space<vmem>>, vector<64x16xf32>
    %c0_2 = arith.constant 0 : index
    %c0_3 = arith.constant 0 : index
    %4 = vector.load %arg3[%c0_2, %c0_3] : memref<16x128xf32, #tpu.memory_space<vmem>>, vector<16x128xf32>
    %cst = arith.constant dense<0.000000e+00> : vector<64x128xf32>
    %5 = tpu.matmul %3, %4, %cst {dimension_numbers = #tpu.dot_dimension_numbers<[1], [0], [0], [1], [0, 0, 1, 1], [], []>} : vector<64x16xf32>, vector<16x128xf32>, vector<64x128xf32> -> vector<64x128xf32>
    %c0_4 = arith.constant 0 : index
    %c0_5 = arith.constant 0 : index
    %6 = vector.load %arg5[%c0_4, %c0_5] : memref<1x128xf32, #tpu.memory_space<vmem>>, vector<1x128xf32>
    %7 = vector.broadcast %6 : vector<1x128xf32> to vector<64x128xf32>
    %8 = arith.addf %5, %7 : vector<64x128xf32>
    %c0_6 = arith.constant 0 : index
    %c0_7 = arith.constant 0 : index
    %9 = vector.load %arg12[%c0_6, %c0_7] : memref<64x128xf32, #tpu.memory_space<vmem>>, vector<64x128xf32>
    tpu.vector_store %arg12[%c0_6, %c0_7], %8 {strides = array<i32>} : memref<64x128xf32, #tpu.memory_space<vmem>>, vector<64x128xf32>,
    %c0_8 = arith.constant 0 : index
    %c0_9 = arith.constant 0 : index
    %10 = vector.load %arg4[%c0_8, %c0_9] : memref<32x128xf32, #tpu.memory_space<vmem>>, vector<32x128xf32>
    %c0_10 = arith.constant 0 : index
    %c0_11 = arith.constant 0 : index
    %11 = vector.load %arg6[%c0_10, %c0_11] : memref<128x32xf32, #tpu.memory_space<vmem>>, vector<128x32xf32>
    %c0_12 = arith.constant 0 : index
    %c0_13 = arith.constant 0 : index
    %12 = vector.load %arg7[%c0_12, %c0_13] : memref<1x32xf32, #tpu.memory_space<vmem>>, vector<1x32xf32>
    %13 = vector.shape_cast %12 : vector<1x32xf32> to vector<1x32xf32>
    %14 = vector.broadcast %13 : vector<1x32xf32> to vector<8x32xf32>
    %c0_14 = arith.constant 0 : index
    %c0_15 = arith.constant 0 : index
    %15 = vector.load %arg11[%c0_14, %c0_15] : memref<8x32xf32, #tpu.memory_space<vmem>>, vector<8x32xf32>
    %c0_i32_16 = arith.constant 0 : i32
    %c8_i32 = arith.constant 8 : i32
    %16 = arith.muli %c0_i32_16, %c8_i32 : i32
    %17 = tpu.assume_multiple %16, 8 : i32
    %18 = arith.index_cast %17 : i32 to index
    %c0_17 = arith.constant 0 : index
    %19 = vector.load %arg12[%18, %c0_17] : memref<64x128xf32, #tpu.memory_space<vmem>>, vector<8x128xf32>
    %cst_18 = arith.constant dense<0.000000e+00> : vector<8x128xf32>
    %20 = tpu.matmul %15, %10, %cst_18 {dimension_numbers = #tpu.dot_dimension_numbers<[1], [0], [0], [1], [0, 0, 1, 1], [], []>} : vector<8x32xf32>, vector<32x128xf32>, vector<8x128xf32> -> vector<8x128xf32>
    %21 = arith.addf %19, %20 : vector<8x128xf32>
    %cst_19 = arith.constant 0.000000e+00 : f32
    %22 = vector.broadcast %cst_19 : f32 to vector<8x128xf32>
    %23 = arith.maximumf %21, %22 : vector<8x128xf32>
    %24 = arith.index_cast %17 : i32 to index
    %c0_20 = arith.constant 0 : index
    %25 = vector.load %arg12[%24, %c0_20] : memref<64x128xf32, #tpu.memory_space<vmem>>, vector<8x128xf32>
    tpu.vector_store %arg12[%24, %c0_20], %23 {strides = array<i32>} : memref<64x128xf32, #tpu.memory_space<vmem>>, vector<8x128xf32>,
    %cst_21 = arith.constant dense<0.000000e+00> : vector<8x32xf32>
    %26 = tpu.matmul %23, %11, %cst_21 {dimension_numbers = #tpu.dot_dimension_numbers<[1], [0], [0], [1], [0, 0, 1, 1], [], []>} : vector<8x128xf32>, vector<128x32xf32>, vector<8x32xf32> -> vector<8x32xf32>
    %27 = arith.addf %26, %14 : vector<8x32xf32>
    %c1_i32 = arith.constant 1 : i32
    %c8_i32_22 = arith.constant 8 : i32
    %28 = arith.muli %c1_i32, %c8_i32_22 : i32
    %29 = tpu.assume_multiple %28, 8 : i32
    %30 = arith.index_cast %29 : i32 to index
    %c0_23 = arith.constant 0 : index
    %31 = vector.load %arg12[%30, %c0_23] : memref<64x128xf32, #tpu.memory_space<vmem>>, vector<8x128xf32>
    %cst_24 = arith.constant dense<0.000000e+00> : vector<8x128xf32>
    %32 = tpu.matmul %27, %10, %cst_24 {dimension_numbers = #tpu.dot_dimension_numbers<[1], [0], [0], [1], [0, 0, 1, 1], [], []>} : vector<8x32xf32>, vector<32x128xf32>, vector<8x128xf32> -> vector<8x128xf32>
    %33 = arith.addf %31, %32 : vector<8x128xf32>
    %cst_25 = arith.constant 0.000000e+00 : f32
    %34 = vector.broadcast %cst_25 : f32 to vector<8x128xf32>
    %35 = arith.maximumf %33, %34 : vector<8x128xf32>
    %36 = arith.index_cast %29 : i32 to index
    %c0_26 = arith.constant 0 : index
    %37 = vector.load %arg12[%36, %c0_26] : memref<64x128xf32, #tpu.memory_space<vmem>>, vector<8x128xf32>
    tpu.vector_store %arg12[%36, %c0_26], %35 {strides = array<i32>} : memref<64x128xf32, #tpu.memory_space<vmem>>, vector<8x128xf32>,
    %cst_27 = arith.constant dense<0.000000e+00> : vector<8x32xf32>
    %38 = tpu.matmul %35, %11, %cst_27 {dimension_numbers = #tpu.dot_dimension_numbers<[1], [0], [0], [1], [0, 0, 1, 1], [], []>} : vector<8x128xf32>, vector<128x32xf32>, vector<8x32xf32> -> vector<8x32xf32>
    %39 = arith.addf %38, %14 : vector<8x32xf32>
    %c2_i32 = arith.constant 2 : i32
    %c8_i32_28 = arith.constant 8 : i32
    %40 = arith.muli %c2_i32, %c8_i32_28 : i32
    %41 = tpu.assume_multiple %40, 8 : i32
    %42 = arith.index_cast %41 : i32 to index
    %c0_29 = arith.constant 0 : index
    %43 = vector.load %arg12[%42, %c0_29] : memref<64x128xf32, #tpu.memory_space<vmem>>, vector<8x128xf32>
    %cst_30 = arith.constant dense<0.000000e+00> : vector<8x128xf32>
    %44 = tpu.matmul %39, %10, %cst_30 {dimension_numbers = #tpu.dot_dimension_numbers<[1], [0], [0], [1], [0, 0, 1, 1], [], []>} : vector<8x32xf32>, vector<32x128xf32>, vector<8x128xf32> -> vector<8x128xf32>
    %45 = arith.addf %43, %44 : vector<8x128xf32>
    %cst_31 = arith.constant 0.000000e+00 : f32
    %46 = vector.broadcast %cst_31 : f32 to vector<8x128xf32>
    %47 = arith.maximumf %45, %46 : vector<8x128xf32>
    %48 = arith.index_cast %41 : i32 to index
    %c0_32 = arith.constant 0 : index
    %49 = vector.load %arg12[%48, %c0_32] : memref<64x128xf32, #tpu.memory_space<vmem>>, vector<8x128xf32>
    tpu.vector_store %arg12[%48, %c0_32], %47 {strides = array<i32>} : memref<64x128xf32, #tpu.memory_space<vmem>>, vector<8x128xf32>,
    %cst_33 = arith.constant dense<0.000000e+00> : vector<8x32xf32>
    %50 = tpu.matmul %47, %11, %cst_33 {dimension_numbers = #tpu.dot_dimension_numbers<[1], [0], [0], [1], [0, 0, 1, 1], [], []>} : vector<8x128xf32>, vector<128x32xf32>, vector<8x32xf32> -> vector<8x32xf32>
    %51 = arith.addf %50, %14 : vector<8x32xf32>
    %c3_i32 = arith.constant 3 : i32
    %c8_i32_34 = arith.constant 8 : i32
    %52 = arith.muli %c3_i32, %c8_i32_34 : i32
    %53 = tpu.assume_multiple %52, 8 : i32
    %54 = arith.index_cast %53 : i32 to index
    %c0_35 = arith.constant 0 : index
    %55 = vector.load %arg12[%54, %c0_35] : memref<64x128xf32, #tpu.memory_space<vmem>>, vector<8x128xf32>
    %cst_36 = arith.constant dense<0.000000e+00> : vector<8x128xf32>
    %56 = tpu.matmul %51, %10, %cst_36 {dimension_numbers = #tpu.dot_dimension_numbers<[1], [0], [0], [1], [0, 0, 1, 1], [], []>} : vector<8x32xf32>, vector<32x128xf32>, vector<8x128xf32> -> vector<8x128xf32>
    %57 = arith.addf %55, %56 : vector<8x128xf32>
    %cst_37 = arith.constant 0.000000e+00 : f32
    %58 = vector.broadcast %cst_37 : f32 to vector<8x128xf32>
    %59 = arith.maximumf %57, %58 : vector<8x128xf32>
    %60 = arith.index_cast %53 : i32 to index
    %c0_38 = arith.constant 0 : index
    %61 = vector.load %arg12[%60, %c0_38] : memref<64x128xf32, #tpu.memory_space<vmem>>, vector<8x128xf32>
    tpu.vector_store %arg12[%60, %c0_38], %59 {strides = array<i32>} : memref<64x128xf32, #tpu.memory_space<vmem>>, vector<8x128xf32>,
    %cst_39 = arith.constant dense<0.000000e+00> : vector<8x32xf32>
    %62 = tpu.matmul %59, %11, %cst_39 {dimension_numbers = #tpu.dot_dimension_numbers<[1], [0], [0], [1], [0, 0, 1, 1], [], []>} : vector<8x128xf32>, vector<128x32xf32>, vector<8x32xf32> -> vector<8x32xf32>
    %63 = arith.addf %62, %14 : vector<8x32xf32>
    %c4_i32 = arith.constant 4 : i32
    %c8_i32_40 = arith.constant 8 : i32
    %64 = arith.muli %c4_i32, %c8_i32_40 : i32
    %65 = tpu.assume_multiple %64, 8 : i32
    %66 = arith.index_cast %65 : i32 to index
    %c0_41 = arith.constant 0 : index
    %67 = vector.load %arg12[%66, %c0_41] : memref<64x128xf32, #tpu.memory_space<vmem>>, vector<8x128xf32>
    %cst_42 = arith.constant dense<0.000000e+00> : vector<8x128xf32>
    %68 = tpu.matmul %63, %10, %cst_42 {dimension_numbers = #tpu.dot_dimension_numbers<[1], [0], [0], [1], [0, 0, 1, 1], [], []>} : vector<8x32xf32>, vector<32x128xf32>, vector<8x128xf32> -> vector<8x128xf32>
    %69 = arith.addf %67, %68 : vector<8x128xf32>
    %cst_43 = arith.constant 0.000000e+00 : f32
    %70 = vector.broadcast %cst_43 : f32 to vector<8x128xf32>
    %71 = arith.maximumf %69, %70 : vector<8x128xf32>
    %72 = arith.index_cast %65 : i32 to index
    %c0_44 = arith.constant 0 : index
    %73 = vector.load %arg12[%72, %c0_44] : memref<64x128xf32, #tpu.memory_space<vmem>>, vector<8x128xf32>
    tpu.vector_store %arg12[%72, %c0_44], %71 {strides = array<i32>} : memref<64x128xf32, #tpu.memory_space<vmem>>, vector<8x128xf32>,
    %cst_45 = arith.constant dense<0.000000e+00> : vector<8x32xf32>
    %74 = tpu.matmul %71, %11, %cst_45 {dimension_numbers = #tpu.dot_dimension_numbers<[1], [0], [0], [1], [0, 0, 1, 1], [], []>} : vector<8x128xf32>, vector<128x32xf32>, vector<8x32xf32> -> vector<8x32xf32>
    %75 = arith.addf %74, %14 : vector<8x32xf32>
    %c5_i32 = arith.constant 5 : i32
    %c8_i32_46 = arith.constant 8 : i32
    %76 = arith.muli %c5_i32, %c8_i32_46 : i32
    %77 = tpu.assume_multiple %76, 8 : i32
    %78 = arith.index_cast %77 : i32 to index
    %c0_47 = arith.constant 0 : index
    %79 = vector.load %arg12[%78, %c0_47] : memref<64x128xf32, #tpu.memory_space<vmem>>, vector<8x128xf32>
    %cst_48 = arith.constant dense<0.000000e+00> : vector<8x128xf32>
    %80 = tpu.matmul %75, %10, %cst_48 {dimension_numbers = #tpu.dot_dimension_numbers<[1], [0], [0], [1], [0, 0, 1, 1], [], []>} : vector<8x32xf32>, vector<32x128xf32>, vector<8x128xf32> -> vector<8x128xf32>
    %81 = arith.addf %79, %80 : vector<8x128xf32>
    %cst_49 = arith.constant 0.000000e+00 : f32
    %82 = vector.broadcast %cst_49 : f32 to vector<8x128xf32>
    %83 = arith.maximumf %81, %82 : vector<8x128xf32>
    %84 = arith.index_cast %77 : i32 to index
    %c0_50 = arith.constant 0 : index
    %85 = vector.load %arg12[%84, %c0_50] : memref<64x128xf32, #tpu.memory_space<vmem>>, vector<8x128xf32>
    tpu.vector_store %arg12[%84, %c0_50], %83 {strides = array<i32>} : memref<64x128xf32, #tpu.memory_space<vmem>>, vector<8x128xf32>,
    %cst_51 = arith.constant dense<0.000000e+00> : vector<8x32xf32>
    %86 = tpu.matmul %83, %11, %cst_51 {dimension_numbers = #tpu.dot_dimension_numbers<[1], [0], [0], [1], [0, 0, 1, 1], [], []>} : vector<8x128xf32>, vector<128x32xf32>, vector<8x32xf32> -> vector<8x32xf32>
    %87 = arith.addf %86, %14 : vector<8x32xf32>
    %c6_i32 = arith.constant 6 : i32
    %c8_i32_52 = arith.constant 8 : i32
    %88 = arith.muli %c6_i32, %c8_i32_52 : i32
    %89 = tpu.assume_multiple %88, 8 : i32
    %90 = arith.index_cast %89 : i32 to index
    %c0_53 = arith.constant 0 : index
    %91 = vector.load %arg12[%90, %c0_53] : memref<64x128xf32, #tpu.memory_space<vmem>>, vector<8x128xf32>
    %cst_54 = arith.constant dense<0.000000e+00> : vector<8x128xf32>
    %92 = tpu.matmul %87, %10, %cst_54 {dimension_numbers = #tpu.dot_dimension_numbers<[1], [0], [0], [1], [0, 0, 1, 1], [], []>} : vector<8x32xf32>, vector<32x128xf32>, vector<8x128xf32> -> vector<8x128xf32>
    %93 = arith.addf %91, %92 : vector<8x128xf32>
    %cst_55 = arith.constant 0.000000e+00 : f32
    %94 = vector.broadcast %cst_55 : f32 to vector<8x128xf32>
    %95 = arith.maximumf %93, %94 : vector<8x128xf32>
    %96 = arith.index_cast %89 : i32 to index
    %c0_56 = arith.constant 0 : index
    %97 = vector.load %arg12[%96, %c0_56] : memref<64x128xf32, #tpu.memory_space<vmem>>, vector<8x128xf32>
    tpu.vector_store %arg12[%96, %c0_56], %95 {strides = array<i32>} : memref<64x128xf32, #tpu.memory_space<vmem>>, vector<8x128xf32>,
    %cst_57 = arith.constant dense<0.000000e+00> : vector<8x32xf32>
    %98 = tpu.matmul %95, %11, %cst_57 {dimension_numbers = #tpu.dot_dimension_numbers<[1], [0], [0], [1], [0, 0, 1, 1], [], []>} : vector<8x128xf32>, vector<128x32xf32>, vector<8x32xf32> -> vector<8x32xf32>
    %99 = arith.addf %98, %14 : vector<8x32xf32>
    %c7_i32 = arith.constant 7 : i32
    %c8_i32_58 = arith.constant 8 : i32
    %100 = arith.muli %c7_i32, %c8_i32_58 : i32
    %101 = tpu.assume_multiple %100, 8 : i32
    %102 = arith.index_cast %101 : i32 to index
    %c0_59 = arith.constant 0 : index
    %103 = vector.load %arg12[%102, %c0_59] : memref<64x128xf32, #tpu.memory_space<vmem>>, vector<8x128xf32>
    %cst_60 = arith.constant dense<0.000000e+00> : vector<8x128xf32>
    %104 = tpu.matmul %99, %10, %cst_60 {dimension_numbers = #tpu.dot_dimension_numbers<[1], [0], [0], [1], [0, 0, 1, 1], [], []>} : vector<8x32xf32>, vector<32x128xf32>, vector<8x128xf32> -> vector<8x128xf32>
    %105 = arith.addf %103, %104 : vector<8x128xf32>
    %cst_61 = arith.constant 0.000000e+00 : f32
    %106 = vector.broadcast %cst_61 : f32 to vector<8x128xf32>
    %107 = arith.maximumf %105, %106 : vector<8x128xf32>
    %108 = arith.index_cast %101 : i32 to index
    %c0_62 = arith.constant 0 : index
    %109 = vector.load %arg12[%108, %c0_62] : memref<64x128xf32, #tpu.memory_space<vmem>>, vector<8x128xf32>
    tpu.vector_store %arg12[%108, %c0_62], %107 {strides = array<i32>} : memref<64x128xf32, #tpu.memory_space<vmem>>, vector<8x128xf32>,
    %cst_63 = arith.constant dense<0.000000e+00> : vector<8x32xf32>
    %110 = tpu.matmul %107, %11, %cst_63 {dimension_numbers = #tpu.dot_dimension_numbers<[1], [0], [0], [1], [0, 0, 1, 1], [], []>} : vector<8x128xf32>, vector<128x32xf32>, vector<8x32xf32> -> vector<8x32xf32>
    %111 = arith.addf %110, %14 : vector<8x32xf32>
    %c8_i32_64 = arith.constant 8 : i32
    %c0_65 = arith.constant 0 : index
    %c0_66 = arith.constant 0 : index
    %112 = vector.load %arg11[%c0_65, %c0_66] : memref<8x32xf32, #tpu.memory_space<vmem>>, vector<8x32xf32>
    tpu.vector_store %arg11[%c0_65, %c0_66], %111 {strides = array<i32>} : memref<8x32xf32, #tpu.memory_space<vmem>>, vector<8x32xf32>,
    %c0_67 = arith.constant 0 : index
    %c0_68 = arith.constant 0 : index
    %113 = vector.load %arg12[%c0_67, %c0_68] : memref<64x128xf32, #tpu.memory_space<vmem>>, vector<64x128xf32>
    %c0_69 = arith.constant 0 : index
    %c0_70 = arith.constant 0 : index
    %114 = vector.load %arg8[%c0_69, %c0_70] : memref<128x16xf32, #tpu.memory_space<vmem>>, vector<128x16xf32>
    %cst_71 = arith.constant dense<0.000000e+00> : vector<64x16xf32>
    %115 = tpu.matmul %113, %114, %cst_71 {dimension_numbers = #tpu.dot_dimension_numbers<[1], [0], [0], [1], [0, 0, 1, 1], [], []>} : vector<64x128xf32>, vector<128x16xf32>, vector<64x16xf32> -> vector<64x16xf32>
    %c0_72 = arith.constant 0 : index
    %c0_73 = arith.constant 0 : index
    %116 = vector.load %arg9[%c0_72, %c0_73] : memref<1x16xf32, #tpu.memory_space<vmem>>, vector<1x16xf32>
    %117 = vector.broadcast %116 : vector<1x16xf32> to vector<64x16xf32>
    %118 = arith.addf %115, %117 : vector<64x16xf32>
    %cst_74 = arith.constant dense<0xFF800000> : vector<64xf32>
    %119 = vector.multi_reduction <maximumf>, %118, %cst_74 [1] : vector<64x16xf32> to vector<64xf32>
    %120 = vector.shape_cast %119 : vector<64xf32> to vector<64x1xf32>
    %121 = vector.broadcast %120 : vector<64x1xf32> to vector<64x16xf32>
    %122 = arith.subf %118, %121 : vector<64x16xf32>
    %123 = math.exp %122 : vector<64x16xf32>
    %cst_75 = arith.constant dense<0.000000e+00> : vector<64xf32>
    %124 = vector.multi_reduction <add>, %123, %cst_75 [1] : vector<64x16xf32> to vector<64xf32>
    %125 = vector.shape_cast %124 : vector<64xf32> to vector<64x1xf32>
    %126 = math.log %125 : vector<64x1xf32>
    %127 = vector.broadcast %126 : vector<64x1xf32> to vector<64x16xf32>
    %128 = arith.subf %122, %127 : vector<64x16xf32>
    %c0_76 = arith.constant 0 : index
    %c0_77 = arith.constant 0 : index
    %129 = vector.load %arg10[%c0_76, %c0_77] : memref<64x16xf32, #tpu.memory_space<vmem>>, vector<64x16xf32>
    tpu.vector_store %arg10[%c0_76, %c0_77], %128 {strides = array<i32>} : memref<64x16xf32, #tpu.memory_space<vmem>>, vector<64x16xf32>,
    return
  }
  func.func @transform_0(%arg0: i32) -> (i32, i32) {
    %c0_i32 = arith.constant 0 : i32
    %c0_i32_0 = arith.constant 0 : i32
    return %arg0, %c0_i32 : i32, i32
  }
  func.func @transform_1(%arg0: i32) -> (i32, i32) {
    %c0_i32 = arith.constant 0 : i32
    %c0_i32_0 = arith.constant 0 : i32
    %c0_i32_1 = arith.constant 0 : i32
    return %c0_i32, %c0_i32_0 : i32, i32
  }
  func.func @transform_2(%arg0: i32) -> (i32, i32) {
    %c0_i32 = arith.constant 0 : i32
    %c0_i32_0 = arith.constant 0 : i32
    %c0_i32_1 = arith.constant 0 : i32
    return %c0_i32, %c0_i32_0 : i32, i32
  }
  func.func @transform_3(%arg0: i32) -> (i32, i32) {
    %c0_i32 = arith.constant 0 : i32
    %c0_i32_0 = arith.constant 0 : i32
    %c0_i32_1 = arith.constant 0 : i32
    return %c0_i32, %c0_i32_0 : i32, i32
  }
  func.func @transform_4(%arg0: i32) -> (i32, i32) {
    %c0_i32 = arith.constant 0 : i32
    %c0_i32_0 = arith.constant 0 : i32
    %c0_i32_1 = arith.constant 0 : i32
    return %c0_i32, %c0_i32_0 : i32, i32
  }
  func.func @transform_5(%arg0: i32) -> (i32, i32) {
    %c0_i32 = arith.constant 0 : i32
    %c0_i32_0 = arith.constant 0 : i32
    %c0_i32_1 = arith.constant 0 : i32
    return %c0_i32, %c0_i32_0 : i32, i32
  }
  func.func @transform_6(%arg0: i32) -> (i32, i32) {
    %c0_i32 = arith.constant 0 : i32
    %c0_i32_0 = arith.constant 0 : i32
    %c0_i32_1 = arith.constant 0 : i32
    return %c0_i32, %c0_i32_0 : i32, i32
  }
  func.func @transform_7(%arg0: i32) -> (i32, i32) {
    %c0_i32 = arith.constant 0 : i32
    %c0_i32_0 = arith.constant 0 : i32
    %c0_i32_1 = arith.constant 0 : i32
    return %c0_i32, %c0_i32_0 : i32, i32
  }
  func.func @transform_8(%arg0: i32) -> (i32, i32) {
    %c0_i32 = arith.constant 0 : i32
    %c0_i32_0 = arith.constant 0 : i32
    %c0_i32_1 = arith.constant 0 : i32
    return %c0_i32, %c0_i32_0 : i32, i32
  }
  func.func @transform_9(%arg0: i32) -> (i32, i32) {
    %c0_i32 = arith.constant 0 : i32
    %c0_i32_0 = arith.constant 0 : i32
    return %arg0, %c0_i32 : i32, i32
  }
  func.func @transform_10(%arg0: i32) -> (i32, i32) {
    %c0_i32 = arith.constant 0 : i32
    %c0_i32_0 = arith.constant 0 : i32
    %c0_i32_1 = arith.constant 0 : i32
    return %c0_i32, %c0_i32_0 : i32, i32
  }
}

</mosaic_0001>

<llo_original>
// kernel: tpu_custom_call.1
$region0: #{tpu_custom_call.1}
  #allocation0 [shape = 'u32[]', space=smem, size = 0x4, offset = 0x4, fixed_abs, tag = 'smem constant byte address 0x4 - core index']
  #allocation1 [shape = 'u32[144,128]{1,0:T(1,128)}', space=vmem, size = 0x12000, scoped, tag = 'internal scratch']
  #allocation2 [shape = 'f32[64,128]{1,0:T(8,128)}', space=vmem, size = 0x8000, scoped, tag = 'scratch operand']
  %s0 = inlined_call_operand.vmem [shape: f32[64,16], index: 0, kind: input, shape index: {}]
  %s1 = inlined_call_operand.vmem [shape: f32[8,32], index: 1, kind: input, shape index: {}]
  %s2 = inlined_call_operand.vmem [shape: f32[16,128], index: 2, kind: input, shape index: {}]
  %s3 = inlined_call_operand.vmem [shape: f32[32,128], index: 3, kind: input, shape index: {}]
  %s4 = inlined_call_operand.vmem [shape: f32[1,128], index: 4, kind: input, shape index: {}]
  %s5 = inlined_call_operand.vmem [shape: f32[128,32], index: 5, kind: input, shape index: {}]
  %s6 = inlined_call_operand.vmem [shape: f32[1,32], index: 6, kind: input, shape index: {}]
  %s7 = inlined_call_operand.vmem [shape: f32[128,16], index: 7, kind: input, shape index: {}]
  %s8 = inlined_call_operand.vmem [shape: f32[1,16], index: 8, kind: input, shape index: {}]
  %s9 = inlined_call_operand.vmem [shape: f32[64,16], index: 9, kind: output, shape index: {0}]
  %s10 = inlined_call_operand.hbm [shape: f32[8,32], index: 10, kind: output, shape index: {1}]
  %11 = xla_tuple %s9, %s10
  %s12 = sld [smem:[#allocation0]]
  $region58: #{tpu_custom_call.1} parent=0
    _
  %s14 = ssub.s32 1, %s12
  %s15 = scalar_select 0, %s14, %s12
  $region1: #{tpu_custom_call.1} parent=0
    #allocation3 [shape = 'u8[4096]{0}', space=vmem, size = 0x1000, scoped, tag = 'output window, operand 1, single buffered']
    #allocation4 [shape = 's32[1]{0}', space=sflag, size = 0x4, scoped, tag = 'scoped memory for tpu_custom_call.1']
    %16 = vsyncpa [#allocation4], 0
    // Predicated region
    $region2: #{tpu_custom_call.1} parent=1 // pred_check
      _
    $region3: #{tpu_custom_call.1} parent=1 // pred_check_branch
      %18 = sbr.rel (0) target = $region5
    $region4: #{tpu_custom_call.1} parent=1 // pred_region
      _
    $region5: #{tpu_custom_call.1} parent=1 // pred_fallthru
      _
    // Predicated region
    $region6: #{tpu_custom_call.1} parent=1 // pred_check
      _
    $region7: #{tpu_custom_call.1} parent=1 // pred_check_branch
      %20 = sbr.rel (0) target = $region9
    $region8: #{tpu_custom_call.1} parent=1 // pred_region
      _
    $region9: #{tpu_custom_call.1} parent=1 // pred_fallthru
      _
    // Predicated region
    $region10: #{tpu_custom_call.1} parent=1 // pred_check
      _
    $region11: #{tpu_custom_call.1} parent=1 // pred_check_branch
      %22 = sbr.rel (0) target = $region13
    $region12: #{tpu_custom_call.1} parent=1 // pred_region
      _
    $region13: #{tpu_custom_call.1} parent=1 // pred_fallthru
      _
    // Predicated region
    $region14: #{tpu_custom_call.1} parent=1 // pred_check
      _
    $region15: #{tpu_custom_call.1} parent=1 // pred_check_branch
      %24 = sbr.rel (0) target = $region17
    $region16: #{tpu_custom_call.1} parent=1 // pred_region
      _
    $region17: #{tpu_custom_call.1} parent=1 // pred_fallthru
      _
    // Predicated region
    $region18: #{tpu_custom_call.1} parent=1 // pred_check
      _
    $region19: #{tpu_custom_call.1} parent=1 // pred_check_branch
      %26 = sbr.rel (0) target = $region21
    $region20: #{tpu_custom_call.1} parent=1 // pred_region
      _
    $region21: #{tpu_custom_call.1} parent=1 // pred_fallthru
      _
    // Predicated region
    $region22: #{tpu_custom_call.1} parent=1 // pred_check
      _
    $region23: #{tpu_custom_call.1} parent=1 // pred_check_branch
      %28 = sbr.rel (0) target = $region25
    $region24: #{tpu_custom_call.1} parent=1 // pred_region
      _
    $region25: #{tpu_custom_call.1} parent=1 // pred_fallthru
      _
    // Predicated region
    $region26: #{tpu_custom_call.1} parent=1 // pred_check
      _
    $region27: #{tpu_custom_call.1} parent=1 // pred_check_branch
      %30 = sbr.rel (0) target = $region29
    $region28: #{tpu_custom_call.1} parent=1 // pred_region
      _
    $region29: #{tpu_custom_call.1} parent=1 // pred_fallthru
      _
    // Predicated region
    $region30: #{tpu_custom_call.1} parent=1 // pred_check
      _
    $region31: #{tpu_custom_call.1} parent=1 // pred_check_branch
      %32 = sbr.rel (0) target = $region33
    $region32: #{tpu_custom_call.1} parent=1 // pred_region
      _
    $region33: #{tpu_custom_call.1} parent=1 // pred_fallthru
      _
    // Predicated region
    $region34: #{tpu_custom_call.1} parent=1 // pred_check
      _
    $region35: #{tpu_custom_call.1} parent=1 // pred_check_branch
      %34 = sbr.rel (0) target = $region37
    $region36: #{tpu_custom_call.1} parent=1 // pred_region
      _
    $region37: #{tpu_custom_call.1} parent=1 // pred_fallthru
      _
    %p35 = scmp.eq.s32.totalorder 0, 0
    // Predicated region
    $region38: #{tpu_custom_call.1} parent=1 // pred_check
      %p36 = pneg %p35
    $region39: #{tpu_custom_call.1} parent=1 // pred_check_branch
      %38 = sbr.rel (%p36) target = $region41
    $region40: #{tpu_custom_call.1} parent=1 // pred_region
      %v39 = vld [vmem:[%s1] sm:$0xff]
      %vm40 = vcmask 261120
      %41 = vst.msk [vmem:[#allocation3] sm:$0xff] %vm40, %v39
    $region41: #{tpu_custom_call.1} parent=1 // pred_fallthru
      _
    %v42 = vld [vmem:[%s0] sm:$0xff]
    %v43 = vld [vmem:[%s0 + $0x8] sm:$0xff]
    %v44 = vld [vmem:[%s0 + $0x10] sm:$0xff]
    %v45 = vld [vmem:[%s0 + $0x18] sm:$0xff]
    %v46 = vld [vmem:[%s0 + $0x20] sm:$0xff]
    %v47 = vld [vmem:[%s0 + $0x28] sm:$0xff]
    %v48 = vld [vmem:[%s0 + $0x30] sm:$0xff]
    %v49 = vld [vmem:[%s0 + $0x38] sm:$0xff]
    %v50 = vld [vmem:[%s2] sm:$0xff]
    %v51 = vld [vmem:[%s2 + $0x8] sm:$0xff]
    %v52 = vld [vmem:[%s4] sm:$0x1]
    %v54 = vlaneseq
    %v55 = vshrl.u32 %v54, 7
    %v56 = vsub.s32 0, %v55
    %v57 = vrot.slane %v52, %v56
    %vm59 = vcmask 130048
    %v61 = vsel %vm59, %v42, 0
    %v64 = vsel %vm59, %v43, 0
    %v67 = vsel %vm59, %v44, 0
    %v70 = vsel %vm59, %v45, 0
    %v73 = vsel %vm59, %v46, 0
    %v76 = vsel %vm59, %v47, 0
    %v79 = vsel %vm59, %v48, 0
    %v82 = vsel %vm59, %v49, 0
    %84 = vmatprep.subr.mxu0 0.0
    %85 = vmatpush1.msra.mxu0 %v50
    %86 = vmatprep.subr.mxu0 0.0
    %87 = vmatpush1.msra.mxu0 %v51
    %88 = vmatprep.subr.mxu0 0.0
    %89 = vmatpush1.msra.mxu0 0.0
    %90 = vmatprep.subr.mxu0 0.0
    %91 = vmatpush1.msra.mxu0 0.0
    %92 = vmatprep.subr.mxu0 0.0
    %93 = vmatpush1.msra.mxu0 0.0
    %94 = vmatprep.subr.mxu0 0.0
    %95 = vmatpush1.msra.mxu0 0.0
    %96 = vmatprep.subr.mxu0 0.0
    %97 = vmatpush1.msra.mxu0 0.0
    %98 = vmatprep.subr.mxu0 0.0
    %99 = vmatpush1.msra.mxu0 0.0
    %100 = vmatprep.subr.mxu0 0.0
    %101 = vmatpush1.msra.mxu0 0.0
    %102 = vmatprep.subr.mxu0 0.0
    %103 = vmatpush1.msra.mxu0 0.0
    %104 = vmatprep.subr.mxu0 0.0
    %105 = vmatpush1.msra.mxu0 0.0
    %106 = vmatprep.subr.mxu0 0.0
    %107 = vmatpush1.msra.mxu0 0.0
    %108 = vmatprep.subr.mxu0 0.0
    %109 = vmatpush1.msra.mxu0 0.0
    %110 = vmatprep.subr.mxu0 0.0
    %111 = vmatpush1.msra.mxu0 0.0
    %112 = vmatprep.subr.mxu0 0.0
    %113 = vmatpush1.msra.mxu0 0.0
    %114 = vmatprep.subr.mxu0 0.0
    %115 = vmatpush1.msra.mxu0 0.0
    %116 = vmatprep.subr.mxu0 0.0
    %117 = vmatpush1.msra.mxu0 0.0
    %118 = vmatprep.subr.mxu0 0.0
    %119 = vmatpush1.msra.mxu0 0.0
    %120 = vmatprep.subr.mxu0 0.0
    %121 = vmatpush1.msra.mxu0 0.0
    %122 = vmatprep.subr.mxu0 0.0
    %123 = vmatpush1.msra.mxu0 0.0
    %124 = vmatprep.subr.mxu0 0.0
    %125 = vmatpush1.msra.mxu0 0.0
    %126 = vmatprep.subr.mxu0 0.0
    %127 = vmatpush1.msra.mxu0 0.0
    %128 = vmatprep.subr.mxu0 0.0
    %129 = vmatpush1.msra.mxu0 0.0
    %130 = vmatprep.subr.mxu0 0.0
    %131 = vmatpush1.msra.mxu0 0.0
    %132 = vmatprep.subr.mxu0 0.0
    %133 = vmatpush1.msra.mxu0 0.0
    %134 = vmatprep.subr.mxu0 0.0
    %135 = vmatpush1.msra.mxu0 0.0
    %136 = vmatprep.subr.mxu0 0.0
    %137 = vmatpush1.msra.mxu0 0.0
    %138 = vmatprep.subr.mxu0 0.0
    %139 = vmatpush1.msra.mxu0 0.0
    %140 = vmatprep.subr.mxu0 0.0
    %141 = vmatpush1.msra.mxu0 0.0
    %142 = vmatprep.subr.mxu0 0.0
    %143 = vmatpush1.msra.mxu0 0.0
    %144 = vmatprep.subr.mxu0 0.0
    %145 = vmatpush1.msra.mxu0 0.0
    %146 = vmatprep.subr.mxu0 0.0
    %147 = vmatpush1.msra.mxu0 0.0
    %148 = vmatprep.mubr.f32.mxu0 0.0
    %149 = vmatmul.mubr.f32.gmra.mrb[0].mxu0 %v61
    %v150 = vpop.f32.mrb[0].mxu0
    %v151 = vadd.f32 %v57, %v150
    %v152 = vpop.f32.mrb[0].mxu0
    %153 = vmatprep.mubr.f32.mxu0 0.0
    %154 = vmatmul.mubr.f32.gmra.mrb[0].mxu0 %v64
    %v155 = vpop.f32.mrb[0].mxu0
    %v156 = vadd.f32 %v57, %v155
    %v157 = vpop.f32.mrb[0].mxu0
    %158 = vmatprep.mubr.f32.mxu0 0.0
    %159 = vmatmul.mubr.f32.gmra.mrb[0].mxu0 %v67
    %v160 = vpop.f32.mrb[0].mxu0
    %v161 = vadd.f32 %v57, %v160
    %v162 = vpop.f32.mrb[0].mxu0
    %163 = vmatprep.mubr.f32.mxu0 0.0
    %164 = vmatmul.mubr.f32.gmra.mrb[0].mxu0 %v70
    %v165 = vpop.f32.mrb[0].mxu0
    %v166 = vadd.f32 %v57, %v165
    %v167 = vpop.f32.mrb[0].mxu0
    %168 = vmatprep.mubr.f32.mxu0 0.0
    %169 = vmatmul.mubr.f32.gmra.mrb[0].mxu0 %v73
    %v170 = vpop.f32.mrb[0].mxu0
    %v171 = vadd.f32 %v57, %v170
    %v172 = vpop.f32.mrb[0].mxu0
    %173 = vmatprep.mubr.f32.mxu0 0.0
    %174 = vmatmul.mubr.f32.gmra.mrb[0].mxu0 %v76
    %v175 = vpop.f32.mrb[0].mxu0
    %v176 = vadd.f32 %v57, %v175
    %v177 = vpop.f32.mrb[0].mxu0
    %178 = vmatprep.mubr.f32.mxu0 0.0
    %179 = vmatmul.mubr.f32.gmra.mrb[0].mxu0 %v79
    %v180 = vpop.f32.mrb[0].mxu0
    %v181 = vadd.f32 %v57, %v180
    %v182 = vpop.f32.mrb[0].mxu0
    %183 = vmatprep.mubr.f32.mxu0 0.0
    %184 = vmatmul.mubr.f32.gmra.mrb[0].mxu0 %v82
    %v185 = vpop.f32.mrb[0].mxu0
    %v186 = vadd.f32 %v57, %v185
    %v187 = vpop.f32.mrb[0].mxu0
    %188 = vdwg.mxu0
    %189 = vst [vmem:[#allocation2] sm:$0xff] %v151
    %190 = vst [vmem:[#allocation2 + $0x8] sm:$0xff] %v156
    %191 = vst [vmem:[#allocation2 + $0x10] sm:$0xff] %v161
    %192 = vst [vmem:[#allocation2 + $0x18] sm:$0xff] %v166
    %193 = vst [vmem:[#allocation2 + $0x20] sm:$0xff] %v171
    %194 = vst [vmem:[#allocation2 + $0x28] sm:$0xff] %v176
    %195 = vst [vmem:[#allocation2 + $0x30] sm:$0xff] %v181
    %196 = vst [vmem:[#allocation2 + $0x38] sm:$0xff] %v186
    %v197 = vld [vmem:[%s3] sm:$0xff]
    %v198 = vld [vmem:[%s3 + $0x8] sm:$0xff]
    %v199 = vld [vmem:[%s3 + $0x10] sm:$0xff]
    %v200 = vld [vmem:[%s3 + $0x18] sm:$0xff]
    %v201 = vld [vmem:[%s5] sm:$0xff]
    %v202 = vld [vmem:[%s5 + $0x8] sm:$0xff]
    %v203 = vld [vmem:[%s5 + $0x10] sm:$0xff]
    %v204 = vld [vmem:[%s5 + $0x18] sm:$0xff]
    %v205 = vld [vmem:[%s5 + $0x20] sm:$0xff]
    %v206 = vld [vmem:[%s5 + $0x28] sm:$0xff]
    %v207 = vld [vmem:[%s5 + $0x30] sm:$0xff]
    %v208 = vld [vmem:[%s5 + $0x38] sm:$0xff]
    %v209 = vld [vmem:[%s5 + $0x40] sm:$0xff]
    %v210 = vld [vmem:[%s5 + $0x48] sm:$0xff]
    %v211 = vld [vmem:[%s5 + $0x50] sm:$0xff]
    %v212 = vld [vmem:[%s5 + $0x58] sm:$0xff]
    %v213 = vld [vmem:[%s5 + $0x60] sm:$0xff]
    %v214 = vld [vmem:[%s5 + $0x68] sm:$0xff]
    %v215 = vld [vmem:[%s5 + $0x70] sm:$0xff]
    %v216 = vld [vmem:[%s5 + $0x78] sm:$0xff]
    %v217 = vld [vmem:[%s6] sm:$0x1]
    %v219 = vlaneseq
    %v220 = vshrl.u32 %v219, 7
    %v221 = vsub.s32 0, %v220
    %v222 = vrot.slane %v217, %v221
    %v224 = vld [vmem:[#allocation3] sm:$0xff]
    %v225 = vld [vmem:[#allocation2] sm:$0xff]
    %vm226 = vcmask 261120
    %v228 = vsel %vm226, %v224, 0
    %230 = vmatprep.subr.mxu0 0.0
    %231 = vmatpush1.msra.mxu0 %v197
    %232 = vmatprep.subr.mxu0 0.0
    %233 = vmatpush1.msra.mxu0 %v198
    %234 = vmatprep.subr.mxu0 0.0
    %235 = vmatpush1.msra.mxu0 %v199
    %236 = vmatprep.subr.mxu0 0.0
    %237 = vmatpush1.msra.mxu0 %v200
    %238 = vmatprep.subr.mxu0 0.0
    %239 = vmatpush1.msra.mxu0 0.0
    %240 = vmatprep.subr.mxu0 0.0
    %241 = vmatpush1.msra.mxu0 0.0
    %242 = vmatprep.subr.mxu0 0.0
    %243 = vmatpush1.msra.mxu0 0.0
    %244 = vmatprep.subr.mxu0 0.0
    %245 = vmatpush1.msra.mxu0 0.0
    %246 = vmatprep.subr.mxu0 0.0
    %247 = vmatpush1.msra.mxu0 0.0
    %248 = vmatprep.subr.mxu0 0.0
    %249 = vmatpush1.msra.mxu0 0.0
    %250 = vmatprep.subr.mxu0 0.0
    %251 = vmatpush1.msra.mxu0 0.0
    %252 = vmatprep.subr.mxu0 0.0
    %253 = vmatpush1.msra.mxu0 0.0
    %254 = vmatprep.subr.mxu0 0.0
    %255 = vmatpush1.msra.mxu0 0.0
    %256 = vmatprep.subr.mxu0 0.0
    %257 = vmatpush1.msra.mxu0 0.0
    %258 = vmatprep.subr.mxu0 0.0
    %259 = vmatpush1.msra.mxu0 0.0
    %260 = vmatprep.subr.mxu0 0.0
    %261 = vmatpush1.msra.mxu0 0.0
    %262 = vmatprep.subr.mxu0 0.0
    %263 = vmatpush1.msra.mxu0 0.0
    %264 = vmatprep.subr.mxu0 0.0
    %265 = vmatpush1.msra.mxu0 0.0
    %266 = vmatprep.subr.mxu0 0.0
    %267 = vmatpush1.msra.mxu0 0.0
    %268 = vmatprep.subr.mxu0 0.0
    %269 = vmatpush1.msra.mxu0 0.0
    %270 = vmatprep.subr.mxu0 0.0
    %271 = vmatpush1.msra.mxu0 0.0
    %272 = vmatprep.subr.mxu0 0.0
    %273 = vmatpush1.msra.mxu0 0.0
    %274 = vmatprep.subr.mxu0 0.0
    %275 = vmatpush1.msra.mxu0 0.0
    %276 = vmatprep.subr.mxu0 0.0
    %277 = vmatpush1.msra.mxu0 0.0
    %278 = vmatprep.subr.mxu0 0.0
    %279 = vmatpush1.msra.mxu0 0.0
    %280 = vmatprep.subr.mxu0 0.0
    %281 = vmatpush1.msra.mxu0 0.0
    %282 = vmatprep.subr.mxu0 0.0
    %283 = vmatpush1.msra.mxu0 0.0
    %284 = vmatprep.subr.mxu0 0.0
    %285 = vmatpush1.msra.mxu0 0.0
    %286 = vmatprep.subr.mxu0 0.0
    %287 = vmatpush1.msra.mxu0 0.0
    %288 = vmatprep.subr.mxu0 0.0
    %289 = vmatpush1.msra.mxu0 0.0
    %290 = vmatprep.subr.mxu0 0.0
    %291 = vmatpush1.msra.mxu0 0.0
    %292 = vmatprep.subr.mxu0 0.0
    %293 = vmatpush1.msra.mxu0 0.0
    %294 = vmatprep.mubr.f32.mxu0 0.0
    %295 = vmatmul.mubr.f32.gmra.mrb[0].mxu0 %v228
    %v296 = vpop.f32.mrb[0].mxu0
    %v297 = vadd.f32 0.0, %v296
    %v298 = vpop.f32.mrb[0].mxu0
    %299 = vdwg.mxu0
    %v300 = vadd.f32 %v225, %v297
    %v301 = vmax.f32 %v300, 0.0
    %302 = vst [vmem:[#allocation2] sm:$0xff] %v301
    %303 = vmatprep.subr.mxu0 0.0
    %304 = vmatpush1.msra.mxu0 %v201
    %305 = vmatprep.subr.mxu0 0.0
    %306 = vmatpush1.msra.mxu0 %v202
    %307 = vmatprep.subr.mxu0 0.0
    %308 = vmatpush1.msra.mxu0 %v203
    %309 = vmatprep.subr.mxu0 0.0
    %310 = vmatpush1.msra.mxu0 %v204
    %311 = vmatprep.subr.mxu0 0.0
    %312 = vmatpush1.msra.mxu0 %v205
    %313 = vmatprep.subr.mxu0 0.0
    %314 = vmatpush1.msra.mxu0 %v206
    %315 = vmatprep.subr.mxu0 0.0
    %316 = vmatpush1.msra.mxu0 %v207
    %317 = vmatprep.subr.mxu0 0.0
    %318 = vmatpush1.msra.mxu0 %v208
    %319 = vmatprep.subr.mxu0 0.0
    %320 = vmatpush1.msra.mxu0 %v209
    %321 = vmatprep.subr.mxu0 0.0
    %322 = vmatpush1.msra.mxu0 %v210
    %323 = vmatprep.subr.mxu0 0.0
    %324 = vmatpush1.msra.mxu0 %v211
    %325 = vmatprep.subr.mxu0 0.0
    %326 = vmatpush1.msra.mxu0 %v212
    %327 = vmatprep.subr.mxu0 0.0
    %328 = vmatpush1.msra.mxu0 %v213
    %329 = vmatprep.subr.mxu0 0.0
    %330 = vmatpush1.msra.mxu0 %v214
    %331 = vmatprep.subr.mxu0 0.0
    %332 = vmatpush1.msra.mxu0 %v215
    %333 = vmatprep.subr.mxu0 0.0
    %334 = vmatpush1.msra.mxu0 %v216
    %335 = vmatprep.subr.mxu0 0.0
    %336 = vmatpush1.msra.mxu0 0.0
    %337 = vmatprep.subr.mxu0 0.0
    %338 = vmatpush1.msra.mxu0 0.0
    %339 = vmatprep.subr.mxu0 0.0
    %340 = vmatpush1.msra.mxu0 0.0
    %341 = vmatprep.subr.mxu0 0.0
    %342 = vmatpush1.msra.mxu0 0.0
    %343 = vmatprep.subr.mxu0 0.0
    %344 = vmatpush1.msra.mxu0 0.0
    %345 = vmatprep.subr.mxu0 0.0
    %346 = vmatpush1.msra.mxu0 0.0
    %347 = vmatprep.subr.mxu0 0.0
    %348 = vmatpush1.msra.mxu0 0.0
    %349 = vmatprep.subr.mxu0 0.0
    %350 = vmatpush1.msra.mxu0 0.0
    %351 = vmatprep.subr.mxu0 0.0
    %352 = vmatpush1.msra.mxu0 0.0
    %353 = vmatprep.subr.mxu0 0.0
    %354 = vmatpush1.msra.mxu0 0.0
    %355 = vmatprep.subr.mxu0 0.0
    %356 = vmatpush1.msra.mxu0 0.0
    %357 = vmatprep.subr.mxu0 0.0
    %358 = vmatpush1.msra.mxu0 0.0
    %359 = vmatprep.subr.mxu0 0.0
    %360 = vmatpush1.msra.mxu0 0.0
    %361 = vmatprep.subr.mxu0 0.0
    %362 = vmatpush1.msra.mxu0 0.0
    %363 = vmatprep.subr.mxu0 0.0
    %364 = vmatpush1.msra.mxu0 0.0
    %365 = vmatprep.subr.mxu0 0.0
    %366 = vmatpush1.msra.mxu0 0.0
    %367 = vmatprep.mubr.f32.mxu0 0.0
    %368 = vmatmul.mubr.f32.gmra.mrb[0].mxu0 %v301
    %v369 = vpop.f32.mrb[0].mxu0
    %v370 = vadd.f32 %v222, %v369
    %v371 = vpop.f32.mrb[0].mxu0
    %372 = vdwg.mxu0
    %s373 = scalar_lea.vmem [#allocation2], 8
    %v374 = vld [vmem:[%s373] sm:$0xff]
    %v376 = vsel %vm226, %v370, 0
    %378 = vmatprep.subr.mxu0 0.0
    %379 = vmatpush1.msra.mxu0 %v197
    %380 = vmatprep.subr.mxu0 0.0
    %381 = vmatpush1.msra.mxu0 %v198
    %382 = vmatprep.subr.mxu0 0.0
    %383 = vmatpush1.msra.mxu0 %v199
    %384 = vmatprep.subr.mxu0 0.0
    %385 = vmatpush1.msra.mxu0 %v200
    %386 = vmatprep.subr.mxu0 0.0
    %387 = vmatpush1.msra.mxu0 0.0
    %388 = vmatprep.subr.mxu0 0.0
    %389 = vmatpush1.msra.mxu0 0.0
    %390 = vmatprep.subr.mxu0 0.0
    %391 = vmatpush1.msra.mxu0 0.0
    %392 = vmatprep.subr.mxu0 0.0
    %393 = vmatpush1.msra.mxu0 0.0
    %394 = vmatprep.subr.mxu0 0.0
    %395 = vmatpush1.msra.mxu0 0.0
    %396 = vmatprep.subr.mxu0 0.0
    %397 = vmatpush1.msra.mxu0 0.0
    %398 = vmatprep.subr.mxu0 0.0
    %399 = vmatpush1.msra.mxu0 0.0
    %400 = vmatprep.subr.mxu0 0.0
    %401 = vmatpush1.msra.mxu0 0.0
    %402 = vmatprep.subr.mxu0 0.0
    %403 = vmatpush1.msra.mxu0 0.0
    %404 = vmatprep.subr.mxu0 0.0
    %405 = vmatpush1.msra.mxu0 0.0
    %406 = vmatprep.subr.mxu0 0.0
    %407 = vmatpush1.msra.mxu0 0.0
    %408 = vmatprep.subr.mxu0 0.0
    %409 = vmatpush1.msra.mxu0 0.0
    %410 = vmatprep.subr.mxu0 0.0
    %411 = vmatpush1.msra.mxu0 0.0
    %412 = vmatprep.subr.mxu0 0.0
    %413 = vmatpush1.msra.mxu0 0.0
    %414 = vmatprep.subr.mxu0 0.0
    %415 = vmatpush1.msra.mxu0 0.0
    %416 = vmatprep.subr.mxu0 0.0
    %417 = vmatpush1.msra.mxu0 0.0
    %418 = vmatprep.subr.mxu0 0.0
    %419 = vmatpush1.msra.mxu0 0.0
    %420 = vmatprep.subr.mxu0 0.0
    %421 = vmatpush1.msra.mxu0 0.0
    %422 = vmatprep.subr.mxu0 0.0
    %423 = vmatpush1.msra.mxu0 0.0
    %424 = vmatprep.subr.mxu0 0.0
    %425 = vmatpush1.msra.mxu0 0.0
    %426 = vmatprep.subr.mxu0 0.0
    %427 = vmatpush1.msra.mxu0 0.0
    %428 = vmatprep.subr.mxu0 0.0
    %429 = vmatpush1.msra.mxu0 0.0
    %430 = vmatprep.subr.mxu0 0.0
    %431 = vmatpush1.msra.mxu0 0.0
    %432 = vmatprep.subr.mxu0 0.0
    %433 = vmatpush1.msra.mxu0 0.0
    %434 = vmatprep.subr.mxu0 0.0
    %435 = vmatpush1.msra.mxu0 0.0
    %436 = vmatprep.subr.mxu0 0.0
    %437 = vmatpush1.msra.mxu0 0.0
    %438 = vmatprep.subr.mxu0 0.0
    %439 = vmatpush1.msra.mxu0 0.0
    %440 = vmatprep.subr.mxu0 0.0
    %441 = vmatpush1.msra.mxu0 0.0
    %442 = vmatprep.mubr.f32.mxu0 0.0
    %443 = vmatmul.mubr.f32.gmra.mrb[0].mxu0 %v376
    %v444 = vpop.f32.mrb[0].mxu0
    %v445 = vadd.f32 0.0, %v444
    %v446 = vpop.f32.mrb[0].mxu0
    %447 = vdwg.mxu0
    %v448 = vadd.f32 %v374, %v445
    %v449 = vmax.f32 %v448, 0.0
    %450 = vst [vmem:[%s373] sm:$0xff] %v449
    %451 = vmatprep.subr.mxu0 0.0
    %452 = vmatpush1.msra.mxu0 %v201
    %453 = vmatprep.subr.mxu0 0.0
    %454 = vmatpush1.msra.mxu0 %v202
    %455 = vmatprep.subr.mxu0 0.0
    %456 = vmatpush1.msra.mxu0 %v203
    %457 = vmatprep.subr.mxu0 0.0
    %458 = vmatpush1.msra.mxu0 %v204
    %459 = vmatprep.subr.mxu0 0.0
    %460 = vmatpush1.msra.mxu0 %v205
    %461 = vmatprep.subr.mxu0 0.0
    %462 = vmatpush1.msra.mxu0 %v206
    %463 = vmatprep.subr.mxu0 0.0
    %464 = vmatpush1.msra.mxu0 %v207
    %465 = vmatprep.subr.mxu0 0.0
    %466 = vmatpush1.msra.mxu0 %v208
    %467 = vmatprep.subr.mxu0 0.0
    %468 = vmatpush1.msra.mxu0 %v209
    %469 = vmatprep.subr.mxu0 0.0
    %470 = vmatpush1.msra.mxu0 %v210
    %471 = vmatprep.subr.mxu0 0.0
    %472 = vmatpush1.msra.mxu0 %v211
    %473 = vmatprep.subr.mxu0 0.0
    %474 = vmatpush1.msra.mxu0 %v212
    %475 = vmatprep.subr.mxu0 0.0
    %476 = vmatpush1.msra.mxu0 %v213
    %477 = vmatprep.subr.mxu0 0.0
    %478 = vmatpush1.msra.mxu0 %v214
    %479 = vmatprep.subr.mxu0 0.0
    %480 = vmatpush1.msra.mxu0 %v215
    %481 = vmatprep.subr.mxu0 0.0
    %482 = vmatpush1.msra.mxu0 %v216
    %483 = vmatprep.subr.mxu0 0.0
    %484 = vmatpush1.msra.mxu0 0.0
    %485 = vmatprep.subr.mxu0 0.0
    %486 = vmatpush1.msra.mxu0 0.0
    %487 = vmatprep.subr.mxu0 0.0
    %488 = vmatpush1.msra.mxu0 0.0
    %489 = vmatprep.subr.mxu0 0.0
    %490 = vmatpush1.msra.mxu0 0.0
    %491 = vmatprep.subr.mxu0 0.0
    %492 = vmatpush1.msra.mxu0 0.0
    %493 = vmatprep.subr.mxu0 0.0
    %494 = vmatpush1.msra.mxu0 0.0
    %495 = vmatprep.subr.mxu0 0.0
    %496 = vmatpush1.msra.mxu0 0.0
    %497 = vmatprep.subr.mxu0 0.0
    %498 = vmatpush1.msra.mxu0 0.0
    %499 = vmatprep.subr.mxu0 0.0
    %500 = vmatpush1.msra.mxu0 0.0
    %501 = vmatprep.subr.mxu0 0.0
    %502 = vmatpush1.msra.mxu0 0.0
    %503 = vmatprep.subr.mxu0 0.0
    %504 = vmatpush1.msra.mxu0 0.0
    %505 = vmatprep.subr.mxu0 0.0
    %506 = vmatpush1.msra.mxu0 0.0
    %507 = vmatprep.subr.mxu0 0.0
    %508 = vmatpush1.msra.mxu0 0.0
    %509 = vmatprep.subr.mxu0 0.0
    %510 = vmatpush1.msra.mxu0 0.0
    %511 = vmatprep.subr.mxu0 0.0
    %512 = vmatpush1.msra.mxu0 0.0
    %513 = vmatprep.subr.mxu0 0.0
    %514 = vmatpush1.msra.mxu0 0.0
    %515 = vmatprep.mubr.f32.mxu0 0.0
    %516 = vmatmul.mubr.f32.gmra.mrb[0].mxu0 %v449
    %v517 = vpop.f32.mrb[0].mxu0
    %v518 = vadd.f32 %v222, %v517
    %v519 = vpop.f32.mrb[0].mxu0
    %520 = vdwg.mxu0
    %s521 = scalar_lea.vmem [#allocation2], 16
    %v522 = vld [vmem:[%s521] sm:$0xff]
    %v524 = vsel %vm226, %v518, 0
    %526 = vmatprep.subr.mxu0 0.0
    %527 = vmatpush1.msra.mxu0 %v197
    %528 = vmatprep.subr.mxu0 0.0
    %529 = vmatpush1.msra.mxu0 %v198
    %530 = vmatprep.subr.mxu0 0.0
    %531 = vmatpush1.msra.mxu0 %v199
    %532 = vmatprep.subr.mxu0 0.0
    %533 = vmatpush1.msra.mxu0 %v200
    %534 = vmatprep.subr.mxu0 0.0
    %535 = vmatpush1.msra.mxu0 0.0
    %536 = vmatprep.subr.mxu0 0.0
    %537 = vmatpush1.msra.mxu0 0.0
    %538 = vmatprep.subr.mxu0 0.0
    %539 = vmatpush1.msra.mxu0 0.0
    %540 = vmatprep.subr.mxu0 0.0
    %541 = vmatpush1.msra.mxu0 0.0
    %542 = vmatprep.subr.mxu0 0.0
    %543 = vmatpush1.msra.mxu0 0.0
    %544 = vmatprep.subr.mxu0 0.0
    %545 = vmatpush1.msra.mxu0 0.0
    %546 = vmatprep.subr.mxu0 0.0
    %547 = vmatpush1.msra.mxu0 0.0
    %548 = vmatprep.subr.mxu0 0.0
    %549 = vmatpush1.msra.mxu0 0.0
    %550 = vmatprep.subr.mxu0 0.0
    %551 = vmatpush1.msra.mxu0 0.0
    %552 = vmatprep.subr.mxu0 0.0
    %553 = vmatpush1.msra.mxu0 0.0
    %554 = vmatprep.subr.mxu0 0.0
    %555 = vmatpush1.msra.mxu0 0.0
    %556 = vmatprep.subr.mxu0 0.0
    %557 = vmatpush1.msra.mxu0 0.0
    %558 = vmatprep.subr.mxu0 0.0
    %559 = vmatpush1.msra.mxu0 0.0
    %560 = vmatprep.subr.mxu0 0.0
    %561 = vmatpush1.msra.mxu0 0.0
    %562 = vmatprep.subr.mxu0 0.0
    %563 = vmatpush1.msra.mxu0 0.0
    %564 = vmatprep.subr.mxu0 0.0
    %565 = vmatpush1.msra.mxu0 0.0
    %566 = vmatprep.subr.mxu0 0.0
    %567 = vmatpush1.msra.mxu0 0.0
    %568 = vmatprep.subr.mxu0 0.0
    %569 = vmatpush1.msra.mxu0 0.0
    %570 = vmatprep.subr.mxu0 0.0
    %571 = vmatpush1.msra.mxu0 0.0
    %572 = vmatprep.subr.mxu0 0.0
    %573 = vmatpush1.msra.mxu0 0.0
    %574 = vmatprep.subr.mxu0 0.0
    %575 = vmatpush1.msra.mxu0 0.0
    %576 = vmatprep.subr.mxu0 0.0
    %577 = vmatpush1.msra.mxu0 0.0
    %578 = vmatprep.subr.mxu0 0.0
    %579 = vmatpush1.msra.mxu0 0.0
    %580 = vmatprep.subr.mxu0 0.0
    %581 = vmatpush1.msra.mxu0 0.0
    %582 = vmatprep.subr.mxu0 0.0
    %583 = vmatpush1.msra.mxu0 0.0
    %584 = vmatprep.subr.mxu0 0.0
    %585 = vmatpush1.msra.mxu0 0.0
    %586 = vmatprep.subr.mxu0 0.0
    %587 = vmatpush1.msra.mxu0 0.0
    %588 = vmatprep.subr.mxu0 0.0
    %589 = vmatpush1.msra.mxu0 0.0
    %590 = vmatprep.mubr.f32.mxu0 0.0
    %591 = vmatmul.mubr.f32.gmra.mrb[0].mxu0 %v524
    %v592 = vpop.f32.mrb[0].mxu0
    %v593 = vadd.f32 0.0, %v592
    %v594 = vpop.f32.mrb[0].mxu0
    %595 = vdwg.mxu0
    %v596 = vadd.f32 %v522, %v593
    %v597 = vmax.f32 %v596, 0.0
    %598 = vst [vmem:[%s521] sm:$0xff] %v597
    %599 = vmatprep.subr.mxu0 0.0
    %600 = vmatpush1.msra.mxu0 %v201
    %601 = vmatprep.subr.mxu0 0.0
    %602 = vmatpush1.msra.mxu0 %v202
    %603 = vmatprep.subr.mxu0 0.0
    %604 = vmatpush1.msra.mxu0 %v203
    %605 = vmatprep.subr.mxu0 0.0
    %606 = vmatpush1.msra.mxu0 %v204
    %607 = vmatprep.subr.mxu0 0.0
    %608 = vmatpush1.msra.mxu0 %v205
    %609 = vmatprep.subr.mxu0 0.0
    %610 = vmatpush1.msra.mxu0 %v206
    %611 = vmatprep.subr.mxu0 0.0
    %612 = vmatpush1.msra.mxu0 %v207
    %613 = vmatprep.subr.mxu0 0.0
    %614 = vmatpush1.msra.mxu0 %v208
    %615 = vmatprep.subr.mxu0 0.0
    %616 = vmatpush1.msra.mxu0 %v209
    %617 = vmatprep.subr.mxu0 0.0
    %618 = vmatpush1.msra.mxu0 %v210
    %619 = vmatprep.subr.mxu0 0.0
    %620 = vmatpush1.msra.mxu0 %v211
    %621 = vmatprep.subr.mxu0 0.0
    %622 = vmatpush1.msra.mxu0 %v212
    %623 = vmatprep.subr.mxu0 0.0
    %624 = vmatpush1.msra.mxu0 %v213
    %625 = vmatprep.subr.mxu0 0.0
    %626 = vmatpush1.msra.mxu0 %v214
    %627 = vmatprep.subr.mxu0 0.0
    %628 = vmatpush1.msra.mxu0 %v215
    %629 = vmatprep.subr.mxu0 0.0
    %630 = vmatpush1.msra.mxu0 %v216
    %631 = vmatprep.subr.mxu0 0.0
    %632 = vmatpush1.msra.mxu0 0.0
    %633 = vmatprep.subr.mxu0 0.0
    %634 = vmatpush1.msra.mxu0 0.0
    %635 = vmatprep.subr.mxu0 0.0
    %636 = vmatpush1.msra.mxu0 0.0
    %637 = vmatprep.subr.mxu0 0.0
    %638 = vmatpush1.msra.mxu0 0.0
    %639 = vmatprep.subr.mxu0 0.0
    %640 = vmatpush1.msra.mxu0 0.0
    %641 = vmatprep.subr.mxu0 0.0
    %642 = vmatpush1.msra.mxu0 0.0
    %643 = vmatprep.subr.mxu0 0.0
    %644 = vmatpush1.msra.mxu0 0.0
    %645 = vmatprep.subr.mxu0 0.0
    %646 = vmatpush1.msra.mxu0 0.0
    %647 = vmatprep.subr.mxu0 0.0
    %648 = vmatpush1.msra.mxu0 0.0
    %649 = vmatprep.subr.mxu0 0.0
    %650 = vmatpush1.msra.mxu0 0.0
    %651 = vmatprep.subr.mxu0 0.0
    %652 = vmatpush1.msra.mxu0 0.0
    %653 = vmatprep.subr.mxu0 0.0
    %654 = vmatpush1.msra.mxu0 0.0
    %655 = vmatprep.subr.mxu0 0.0
    %656 = vmatpush1.msra.mxu0 0.0
    %657 = vmatprep.subr.mxu0 0.0
    %658 = vmatpush1.msra.mxu0 0.0
    %659 = vmatprep.subr.mxu0 0.0
    %660 = vmatpush1.msra.mxu0 0.0
    %661 = vmatprep.subr.mxu0 0.0
    %662 = vmatpush1.msra.mxu0 0.0
    %663 = vmatprep.mubr.f32.mxu0 0.0
    %664 = vmatmul.mubr.f32.gmra.mrb[0].mxu0 %v597
    %v665 = vpop.f32.mrb[0].mxu0
    %v666 = vadd.f32 %v222, %v665
    %v667 = vpop.f32.mrb[0].mxu0
    %668 = vdwg.mxu0
    %s669 = scalar_lea.vmem [#allocation2], 24
    %v670 = vld [vmem:[%s669] sm:$0xff]
    %v672 = vsel %vm226, %v666, 0
    %674 = vmatprep.subr.mxu0 0.0
    %675 = vmatpush1.msra.mxu0 %v197
    %676 = vmatprep.subr.mxu0 0.0
    %677 = vmatpush1.msra.mxu0 %v198
    %678 = vmatprep.subr.mxu0 0.0
    %679 = vmatpush1.msra.mxu0 %v199
    %680 = vmatprep.subr.mxu0 0.0
    %681 = vmatpush1.msra.mxu0 %v200
    %682 = vmatprep.subr.mxu0 0.0
    %683 = vmatpush1.msra.mxu0 0.0
    %684 = vmatprep.subr.mxu0 0.0
    %685 = vmatpush1.msra.mxu0 0.0
    %686 = vmatprep.subr.mxu0 0.0
    %687 = vmatpush1.msra.mxu0 0.0
    %688 = vmatprep.subr.mxu0 0.0
    %689 = vmatpush1.msra.mxu0 0.0
    %690 = vmatprep.subr.mxu0 0.0
    %691 = vmatpush1.msra.mxu0 0.0
    %692 = vmatprep.subr.mxu0 0.0
    %693 = vmatpush1.msra.mxu0 0.0
    %694 = vmatprep.subr.mxu0 0.0
    %695 = vmatpush1.msra.mxu0 0.0
    %696 = vmatprep.subr.mxu0 0.0
    %697 = vmatpush1.msra.mxu0 0.0
    %698 = vmatprep.subr.mxu0 0.0
    %699 = vmatpush1.msra.mxu0 0.0
    %700 = vmatprep.subr.mxu0 0.0
    %701 = vmatpush1.msra.mxu0 0.0
    %702 = vmatprep.subr.mxu0 0.0
    %703 = vmatpush1.msra.mxu0 0.0
    %704 = vmatprep.subr.mxu0 0.0
    %705 = vmatpush1.msra.mxu0 0.0
    %706 = vmatprep.subr.mxu0 0.0
    %707 = vmatpush1.msra.mxu0 0.0
    %708 = vmatprep.subr.mxu0 0.0
    %709 = vmatpush1.msra.mxu0 0.0
    %710 = vmatprep.subr.mxu0 0.0
    %711 = vmatpush1.msra.mxu0 0.0
    %712 = vmatprep.subr.mxu0 0.0
    %713 = vmatpush1.msra.mxu0 0.0
    %714 = vmatprep.subr.mxu0 0.0
    %715 = vmatpush1.msra.mxu0 0.0
    %716 = vmatprep.subr.mxu0 0.0
    %717 = vmatpush1.msra.mxu0 0.0
    %718 = vmatprep.subr.mxu0 0.0
    %719 = vmatpush1.msra.mxu0 0.0
    %720 = vmatprep.subr.mxu0 0.0
    %721 = vmatpush1.msra.mxu0 0.0
    %722 = vmatprep.subr.mxu0 0.0
    %723 = vmatpush1.msra.mxu0 0.0
    %724 = vmatprep.subr.mxu0 0.0
    %725 = vmatpush1.msra.mxu0 0.0
    %726 = vmatprep.subr.mxu0 0.0
    %727 = vmatpush1.msra.mxu0 0.0
    %728 = vmatprep.subr.mxu0 0.0
    %729 = vmatpush1.msra.mxu0 0.0
    %730 = vmatprep.subr.mxu0 0.0
    %731 = vmatpush1.msra.mxu0 0.0
    %732 = vmatprep.subr.mxu0 0.0
    %733 = vmatpush1.msra.mxu0 0.0
    %734 = vmatprep.subr.mxu0 0.0
    %735 = vmatpush1.msra.mxu0 0.0
    %736 = vmatprep.subr.mxu0 0.0
    %737 = vmatpush1.msra.mxu0 0.0
    %738 = vmatprep.mubr.f32.mxu0 0.0
    %739 = vmatmul.mubr.f32.gmra.mrb[0].mxu0 %v672
    %v740 = vpop.f32.mrb[0].mxu0
    %v741 = vadd.f32 0.0, %v740
    %v742 = vpop.f32.mrb[0].mxu0
    %743 = vdwg.mxu0
    %v744 = vadd.f32 %v670, %v741
    %v745 = vmax.f32 %v744, 0.0
    %746 = vst [vmem:[%s669] sm:$0xff] %v745
    %747 = vmatprep.subr.mxu0 0.0
    %748 = vmatpush1.msra.mxu0 %v201
    %749 = vmatprep.subr.mxu0 0.0
    %750 = vmatpush1.msra.mxu0 %v202
    %751 = vmatprep.subr.mxu0 0.0
    %752 = vmatpush1.msra.mxu0 %v203
    %753 = vmatprep.subr.mxu0 0.0
    %754 = vmatpush1.msra.mxu0 %v204
    %755 = vmatprep.subr.mxu0 0.0
    %756 = vmatpush1.msra.mxu0 %v205
    %757 = vmatprep.subr.mxu0 0.0
    %758 = vmatpush1.msra.mxu0 %v206
    %759 = vmatprep.subr.mxu0 0.0
    %760 = vmatpush1.msra.mxu0 %v207
    %761 = vmatprep.subr.mxu0 0.0
    %762 = vmatpush1.msra.mxu0 %v208
    %763 = vmatprep.subr.mxu0 0.0
    %764 = vmatpush1.msra.mxu0 %v209
    %765 = vmatprep.subr.mxu0 0.0
    %766 = vmatpush1.msra.mxu0 %v210
    %767 = vmatprep.subr.mxu0 0.0
    %768 = vmatpush1.msra.mxu0 %v211
    %769 = vmatprep.subr.mxu0 0.0
    %770 = vmatpush1.msra.mxu0 %v212
    %771 = vmatprep.subr.mxu0 0.0
    %772 = vmatpush1.msra.mxu0 %v213
    %773 = vmatprep.subr.mxu0 0.0
    %774 = vmatpush1.msra.mxu0 %v214
    %775 = vmatprep.subr.mxu0 0.0
    %776 = vmatpush1.msra.mxu0 %v215
    %777 = vmatprep.subr.mxu0 0.0
    %778 = vmatpush1.msra.mxu0 %v216
    %779 = vmatprep.subr.mxu0 0.0
    %780 = vmatpush1.msra.mxu0 0.0
    %781 = vmatprep.subr.mxu0 0.0
    %782 = vmatpush1.msra.mxu0 0.0
    %783 = vmatprep.subr.mxu0 0.0
    %784 = vmatpush1.msra.mxu0 0.0
    %785 = vmatprep.subr.mxu0 0.0
    %786 = vmatpush1.msra.mxu0 0.0
    %787 = vmatprep.subr.mxu0 0.0
    %788 = vmatpush1.msra.mxu0 0.0
    %789 = vmatprep.subr.mxu0 0.0
    %790 = vmatpush1.msra.mxu0 0.0
    %791 = vmatprep.subr.mxu0 0.0
    %792 = vmatpush1.msra.mxu0 0.0
    %793 = vmatprep.subr.mxu0 0.0
    %794 = vmatpush1.msra.mxu0 0.0
    %795 = vmatprep.subr.mxu0 0.0
    %796 = vmatpush1.msra.mxu0 0.0
    %797 = vmatprep.subr.mxu0 0.0
    %798 = vmatpush1.msra.mxu0 0.0
    %799 = vmatprep.subr.mxu0 0.0
    %800 = vmatpush1.msra.mxu0 0.0
    %801 = vmatprep.subr.mxu0 0.0
    %802 = vmatpush1.msra.mxu0 0.0
    %803 = vmatprep.subr.mxu0 0.0
    %804 = vmatpush1.msra.mxu0 0.0
    %805 = vmatprep.subr.mxu0 0.0
    %806 = vmatpush1.msra.mxu0 0.0
    %807 = vmatprep.subr.mxu0 0.0
    %808 = vmatpush1.msra.mxu0 0.0
    %809 = vmatprep.subr.mxu0 0.0
    %810 = vmatpush1.msra.mxu0 0.0
    %811 = vmatprep.mubr.f32.mxu0 0.0
    %812 = vmatmul.mubr.f32.gmra.mrb[0].mxu0 %v745
    %v813 = vpop.f32.mrb[0].mxu0
    %v814 = vadd.f32 %v222, %v813
    %v815 = vpop.f32.mrb[0].mxu0
    %816 = vdwg.mxu0
    %s817 = scalar_lea.vmem [#allocation2], 32
    %v818 = vld [vmem:[%s817] sm:$0xff]
    %v820 = vsel %vm226, %v814, 0
    %822 = vmatprep.subr.mxu0 0.0
    %823 = vmatpush1.msra.mxu0 %v197
    %824 = vmatprep.subr.mxu0 0.0
    %825 = vmatpush1.msra.mxu0 %v198
    %826 = vmatprep.subr.mxu0 0.0
    %827 = vmatpush1.msra.mxu0 %v199
    %828 = vmatprep.subr.mxu0 0.0
    %829 = vmatpush1.msra.mxu0 %v200
    %830 = vmatprep.subr.mxu0 0.0
    %831 = vmatpush1.msra.mxu0 0.0
    %832 = vmatprep.subr.mxu0 0.0
    %833 = vmatpush1.msra.mxu0 0.0
    %834 = vmatprep.subr.mxu0 0.0
    %835 = vmatpush1.msra.mxu0 0.0
    %836 = vmatprep.subr.mxu0 0.0
    %837 = vmatpush1.msra.mxu0 0.0
    %838 = vmatprep.subr.mxu0 0.0
    %839 = vmatpush1.msra.mxu0 0.0
    %840 = vmatprep.subr.mxu0 0.0
    %841 = vmatpush1.msra.mxu0 0.0
    %842 = vmatprep.subr.mxu0 0.0
    %843 = vmatpush1.msra.mxu0 0.0
    %844 = vmatprep.subr.mxu0 0.0
    %845 = vmatpush1.msra.mxu0 0.0
    %846 = vmatprep.subr.mxu0 0.0
    %847 = vmatpush1.msra.mxu0 0.0
    %848 = vmatprep.subr.mxu0 0.0
    %849 = vmatpush1.msra.mxu0 0.0
    %850 = vmatprep.subr.mxu0 0.0
    %851 = vmatpush1.msra.mxu0 0.0
    %852 = vmatprep.subr.mxu0 0.0
    %853 = vmatpush1.msra.mxu0 0.0
    %854 = vmatprep.subr.mxu0 0.0
    %855 = vmatpush1.msra.mxu0 0.0
    %856 = vmatprep.subr.mxu0 0.0
    %857 = vmatpush1.msra.mxu0 0.0
    %858 = vmatprep.subr.mxu0 0.0
    %859 = vmatpush1.msra.mxu0 0.0
    %860 = vmatprep.subr.mxu0 0.0
    %861 = vmatpush1.msra.mxu0 0.0
    %862 = vmatprep.subr.mxu0 0.0
    %863 = vmatpush1.msra.mxu0 0.0
    %864 = vmatprep.subr.mxu0 0.0
    %865 = vmatpush1.msra.mxu0 0.0
    %866 = vmatprep.subr.mxu0 0.0
    %867 = vmatpush1.msra.mxu0 0.0
    %868 = vmatprep.subr.mxu0 0.0
    %869 = vmatpush1.msra.mxu0 0.0
    %870 = vmatprep.subr.mxu0 0.0
    %871 = vmatpush1.msra.mxu0 0.0
    %872 = vmatprep.subr.mxu0 0.0
    %873 = vmatpush1.msra.mxu0 0.0
    %874 = vmatprep.subr.mxu0 0.0
    %875 = vmatpush1.msra.mxu0 0.0
    %876 = vmatprep.subr.mxu0 0.0
    %877 = vmatpush1.msra.mxu0 0.0
    %878 = vmatprep.subr.mxu0 0.0
    %879 = vmatpush1.msra.mxu0 0.0
    %880 = vmatprep.subr.mxu0 0.0
    %881 = vmatpush1.msra.mxu0 0.0
    %882 = vmatprep.subr.mxu0 0.0
    %883 = vmatpush1.msra.mxu0 0.0
    %884 = vmatprep.subr.mxu0 0.0
    %885 = vmatpush1.msra.mxu0 0.0
    %886 = vmatprep.mubr.f32.mxu0 0.0
    %887 = vmatmul.mubr.f32.gmra.mrb[0].mxu0 %v820
    %v888 = vpop.f32.mrb[0].mxu0
    %v889 = vadd.f32 0.0, %v888
    %v890 = vpop.f32.mrb[0].mxu0
    %891 = vdwg.mxu0
    %v892 = vadd.f32 %v818, %v889
    %v893 = vmax.f32 %v892, 0.0
    %894 = vst [vmem:[%s817] sm:$0xff] %v893
    %895 = vmatprep.subr.mxu0 0.0
    %896 = vmatpush1.msra.mxu0 %v201
    %897 = vmatprep.subr.mxu0 0.0
    %898 = vmatpush1.msra.mxu0 %v202
    %899 = vmatprep.subr.mxu0 0.0
    %900 = vmatpush1.msra.mxu0 %v203
    %901 = vmatprep.subr.mxu0 0.0
    %902 = vmatpush1.msra.mxu0 %v204
    %903 = vmatprep.subr.mxu0 0.0
    %904 = vmatpush1.msra.mxu0 %v205
    %905 = vmatprep.subr.mxu0 0.0
    %906 = vmatpush1.msra.mxu0 %v206
    %907 = vmatprep.subr.mxu0 0.0
    %908 = vmatpush1.msra.mxu0 %v207
    %909 = vmatprep.subr.mxu0 0.0
    %910 = vmatpush1.msra.mxu0 %v208
    %911 = vmatprep.subr.mxu0 0.0
    %912 = vmatpush1.msra.mxu0 %v209
    %913 = vmatprep.subr.mxu0 0.0
    %914 = vmatpush1.msra.mxu0 %v210
    %915 = vmatprep.subr.mxu0 0.0
    %916 = vmatpush1.msra.mxu0 %v211
    %917 = vmatprep.subr.mxu0 0.0
    %918 = vmatpush1.msra.mxu0 %v212
    %919 = vmatprep.subr.mxu0 0.0
    %920 = vmatpush1.msra.mxu0 %v213
    %921 = vmatprep.subr.mxu0 0.0
    %922 = vmatpush1.msra.mxu0 %v214
    %923 = vmatprep.subr.mxu0 0.0
    %924 = vmatpush1.msra.mxu0 %v215
    %925 = vmatprep.subr.mxu0 0.0
    %926 = vmatpush1.msra.mxu0 %v216
    %927 = vmatprep.subr.mxu0 0.0
    %928 = vmatpush1.msra.mxu0 0.0
    %929 = vmatprep.subr.mxu0 0.0
    %930 = vmatpush1.msra.mxu0 0.0
    %931 = vmatprep.subr.mxu0 0.0
    %932 = vmatpush1.msra.mxu0 0.0
    %933 = vmatprep.subr.mxu0 0.0
    %934 = vmatpush1.msra.mxu0 0.0
    %935 = vmatprep.subr.mxu0 0.0
    %936 = vmatpush1.msra.mxu0 0.0
    %937 = vmatprep.subr.mxu0 0.0
    %938 = vmatpush1.msra.mxu0 0.0
    %939 = vmatprep.subr.mxu0 0.0
    %940 = vmatpush1.msra.mxu0 0.0
    %941 = vmatprep.subr.mxu0 0.0
    %942 = vmatpush1.msra.mxu0 0.0
    %943 = vmatprep.subr.mxu0 0.0
    %944 = vmatpush1.msra.mxu0 0.0
    %945 = vmatprep.subr.mxu0 0.0
    %946 = vmatpush1.msra.mxu0 0.0
    %947 = vmatprep.subr.mxu0 0.0
    %948 = vmatpush1.msra.mxu0 0.0
    %949 = vmatprep.subr.mxu0 0.0
    %950 = vmatpush1.msra.mxu0 0.0
    %951 = vmatprep.subr.mxu0 0.0
    %952 = vmatpush1.msra.mxu0 0.0
    %953 = vmatprep.subr.mxu0 0.0
    %954 = vmatpush1.msra.mxu0 0.0
    %955 = vmatprep.subr.mxu0 0.0
    %956 = vmatpush1.msra.mxu0 0.0
    %957 = vmatprep.subr.mxu0 0.0
    %958 = vmatpush1.msra.mxu0 0.0
    %959 = vmatprep.mubr.f32.mxu0 0.0
    %960 = vmatmul.mubr.f32.gmra.mrb[0].mxu0 %v893
    %v961 = vpop.f32.mrb[0].mxu0
    %v962 = vadd.f32 %v222, %v961
    %v963 = vpop.f32.mrb[0].mxu0
    %964 = vdwg.mxu0
    %s965 = scalar_lea.vmem [#allocation2], 40
    %v966 = vld [vmem:[%s965] sm:$0xff]
    %v968 = vsel %vm226, %v962, 0
    %970 = vmatprep.subr.mxu0 0.0
    %971 = vmatpush1.msra.mxu0 %v197
    %972 = vmatprep.subr.mxu0 0.0
    %973 = vmatpush1.msra.mxu0 %v198
    %974 = vmatprep.subr.mxu0 0.0
    %975 = vmatpush1.msra.mxu0 %v199
    %976 = vmatprep.subr.mxu0 0.0
    %977 = vmatpush1.msra.mxu0 %v200
    %978 = vmatprep.subr.mxu0 0.0
    %979 = vmatpush1.msra.mxu0 0.0
    %980 = vmatprep.subr.mxu0 0.0
    %981 = vmatpush1.msra.mxu0 0.0
    %982 = vmatprep.subr.mxu0 0.0
    %983 = vmatpush1.msra.mxu0 0.0
    %984 = vmatprep.subr.mxu0 0.0
    %985 = vmatpush1.msra.mxu0 0.0
    %986 = vmatprep.subr.mxu0 0.0
    %987 = vmatpush1.msra.mxu0 0.0
    %988 = vmatprep.subr.mxu0 0.0
    %989 = vmatpush1.msra.mxu0 0.0
    %990 = vmatprep.subr.mxu0 0.0
    %991 = vmatpush1.msra.mxu0 0.0
    %992 = vmatprep.subr.mxu0 0.0
    %993 = vmatpush1.msra.mxu0 0.0
    %994 = vmatprep.subr.mxu0 0.0
    %995 = vmatpush1.msra.mxu0 0.0
    %996 = vmatprep.subr.mxu0 0.0
    %997 = vmatpush1.msra.mxu0 0.0
    %998 = vmatprep.subr.mxu0 0.0
    %999 = vmatpush1.msra.mxu0 0.0
    %1000 = vmatprep.subr.mxu0 0.0
    %1001 = vmatpush1.msra.mxu0 0.0
    %1002 = vmatprep.subr.mxu0 0.0
    %1003 = vmatpush1.msra.mxu0 0.0
    %1004 = vmatprep.subr.mxu0 0.0
    %1005 = vmatpush1.msra.mxu0 0.0
    %1006 = vmatprep.subr.mxu0 0.0
    %1007 = vmatpush1.msra.mxu0 0.0
    %1008 = vmatprep.subr.mxu0 0.0
    %1009 = vmatpush1.msra.mxu0 0.0
    %1010 = vmatprep.subr.mxu0 0.0
    %1011 = vmatpush1.msra.mxu0 0.0
    %1012 = vmatprep.subr.mxu0 0.0
    %1013 = vmatpush1.msra.mxu0 0.0
    %1014 = vmatprep.subr.mxu0 0.0
    %1015 = vmatpush1.msra.mxu0 0.0
    %1016 = vmatprep.subr.mxu0 0.0
    %1017 = vmatpush1.msra.mxu0 0.0
    %1018 = vmatprep.subr.mxu0 0.0
    %1019 = vmatpush1.msra.mxu0 0.0
    %1020 = vmatprep.subr.mxu0 0.0
    %1021 = vmatpush1.msra.mxu0 0.0
    %1022 = vmatprep.subr.mxu0 0.0
    %1023 = vmatpush1.msra.mxu0 0.0
    %1024 = vmatprep.subr.mxu0 0.0
    %1025 = vmatpush1.msra.mxu0 0.0
    %1026 = vmatprep.subr.mxu0 0.0
    %1027 = vmatpush1.msra.mxu0 0.0
    %1028 = vmatprep.subr.mxu0 0.0
    %1029 = vmatpush1.msra.mxu0 0.0
    %1030 = vmatprep.subr.mxu0 0.0
    %1031 = vmatpush1.msra.mxu0 0.0
    %1032 = vmatprep.subr.mxu0 0.0
    %1033 = vmatpush1.msra.mxu0 0.0
    %1034 = vmatprep.mubr.f32.mxu0 0.0
    %1035 = vmatmul.mubr.f32.gmra.mrb[0].mxu0 %v968
    %v1036 = vpop.f32.mrb[0].mxu0
    %v1037 = vadd.f32 0.0, %v1036
    %v1038 = vpop.f32.mrb[0].mxu0
    %1039 = vdwg.mxu0
    %v1040 = vadd.f32 %v966, %v1037
    %v1041 = vmax.f32 %v1040, 0.0
    %1042 = vst [vmem:[%s965] sm:$0xff] %v1041
    %1043 = vmatprep.subr.mxu0 0.0
    %1044 = vmatpush1.msra.mxu0 %v201
    %1045 = vmatprep.subr.mxu0 0.0
    %1046 = vmatpush1.msra.mxu0 %v202
    %1047 = vmatprep.subr.mxu0 0.0
    %1048 = vmatpush1.msra.mxu0 %v203
    %1049 = vmatprep.subr.mxu0 0.0
    %1050 = vmatpush1.msra.mxu0 %v204
    %1051 = vmatprep.subr.mxu0 0.0
    %1052 = vmatpush1.msra.mxu0 %v205
    %1053 = vmatprep.subr.mxu0 0.0
    %1054 = vmatpush1.msra.mxu0 %v206
    %1055 = vmatprep.subr.mxu0 0.0
    %1056 = vmatpush1.msra.mxu0 %v207
    %1057 = vmatprep.subr.mxu0 0.0
    %1058 = vmatpush1.msra.mxu0 %v208
    %1059 = vmatprep.subr.mxu0 0.0
    %1060 = vmatpush1.msra.mxu0 %v209
    %1061 = vmatprep.subr.mxu0 0.0
    %1062 = vmatpush1.msra.mxu0 %v210
    %1063 = vmatprep.subr.mxu0 0.0
    %1064 = vmatpush1.msra.mxu0 %v211
    %1065 = vmatprep.subr.mxu0 0.0
    %1066 = vmatpush1.msra.mxu0 %v212
    %1067 = vmatprep.subr.mxu0 0.0
    %1068 = vmatpush1.msra.mxu0 %v213
    %1069 = vmatprep.subr.mxu0 0.0
    %1070 = vmatpush1.msra.mxu0 %v214
    %1071 = vmatprep.subr.mxu0 0.0
    %1072 = vmatpush1.msra.mxu0 %v215
    %1073 = vmatprep.subr.mxu0 0.0
    %1074 = vmatpush1.msra.mxu0 %v216
    %1075 = vmatprep.subr.mxu0 0.0
    %1076 = vmatpush1.msra.mxu0 0.0
    %1077 = vmatprep.subr.mxu0 0.0
    %1078 = vmatpush1.msra.mxu0 0.0
    %1079 = vmatprep.subr.mxu0 0.0
    %1080 = vmatpush1.msra.mxu0 0.0
    %1081 = vmatprep.subr.mxu0 0.0
    %1082 = vmatpush1.msra.mxu0 0.0
    %1083 = vmatprep.subr.mxu0 0.0
    %1084 = vmatpush1.msra.mxu0 0.0
    %1085 = vmatprep.subr.mxu0 0.0
    %1086 = vmatpush1.msra.mxu0 0.0
    %1087 = vmatprep.subr.mxu0 0.0
    %1088 = vmatpush1.msra.mxu0 0.0
    %1089 = vmatprep.subr.mxu0 0.0
    %1090 = vmatpush1.msra.mxu0 0.0
    %1091 = vmatprep.subr.mxu0 0.0
    %1092 = vmatpush1.msra.mxu0 0.0
    %1093 = vmatprep.subr.mxu0 0.0
    %1094 = vmatpush1.msra.mxu0 0.0
    %1095 = vmatprep.subr.mxu0 0.0
    %1096 = vmatpush1.msra.mxu0 0.0
    %1097 = vmatprep.subr.mxu0 0.0
    %1098 = vmatpush1.msra.mxu0 0.0
    %1099 = vmatprep.subr.mxu0 0.0
    %1100 = vmatpush1.msra.mxu0 0.0
    %1101 = vmatprep.subr.mxu0 0.0
    %1102 = vmatpush1.msra.mxu0 0.0
    %1103 = vmatprep.subr.mxu0 0.0
    %1104 = vmatpush1.msra.mxu0 0.0
    %1105 = vmatprep.subr.mxu0 0.0
    %1106 = vmatpush1.msra.mxu0 0.0
    %1107 = vmatprep.mubr.f32.mxu0 0.0
    %1108 = vmatmul.mubr.f32.gmra.mrb[0].mxu0 %v1041
    %v1109 = vpop.f32.mrb[0].mxu0
    %v1110 = vadd.f32 %v222, %v1109
    %v1111 = vpop.f32.mrb[0].mxu0
    %1112 = vdwg.mxu0
    %s1113 = scalar_lea.vmem [#allocation2], 48
    %v1114 = vld [vmem:[%s1113] sm:$0xff]
    %v1116 = vsel %vm226, %v1110, 0
    %1118 = vmatprep.subr.mxu0 0.0
    %1119 = vmatpush1.msra.mxu0 %v197
    %1120 = vmatprep.subr.mxu0 0.0
    %1121 = vmatpush1.msra.mxu0 %v198
    %1122 = vmatprep.subr.mxu0 0.0
    %1123 = vmatpush1.msra.mxu0 %v199
    %1124 = vmatprep.subr.mxu0 0.0
    %1125 = vmatpush1.msra.mxu0 %v200
    %1126 = vmatprep.subr.mxu0 0.0
    %1127 = vmatpush1.msra.mxu0 0.0
    %1128 = vmatprep.subr.mxu0 0.0
    %1129 = vmatpush1.msra.mxu0 0.0
    %1130 = vmatprep.subr.mxu0 0.0
    %1131 = vmatpush1.msra.mxu0 0.0
    %1132 = vmatprep.subr.mxu0 0.0
    %1133 = vmatpush1.msra.mxu0 0.0
    %1134 = vmatprep.subr.mxu0 0.0
    %1135 = vmatpush1.msra.mxu0 0.0
    %1136 = vmatprep.subr.mxu0 0.0
    %1137 = vmatpush1.msra.mxu0 0.0
    %1138 = vmatprep.subr.mxu0 0.0
    %1139 = vmatpush1.msra.mxu0 0.0
    %1140 = vmatprep.subr.mxu0 0.0
    %1141 = vmatpush1.msra.mxu0 0.0
    %1142 = vmatprep.subr.mxu0 0.0
    %1143 = vmatpush1.msra.mxu0 0.0
    %1144 = vmatprep.subr.mxu0 0.0
    %1145 = vmatpush1.msra.mxu0 0.0
    %1146 = vmatprep.subr.mxu0 0.0
    %1147 = vmatpush1.msra.mxu0 0.0
    %1148 = vmatprep.subr.mxu0 0.0
    %1149 = vmatpush1.msra.mxu0 0.0
    %1150 = vmatprep.subr.mxu0 0.0
    %1151 = vmatpush1.msra.mxu0 0.0
    %1152 = vmatprep.subr.mxu0 0.0
    %1153 = vmatpush1.msra.mxu0 0.0
    %1154 = vmatprep.subr.mxu0 0.0
    %1155 = vmatpush1.msra.mxu0 0.0
    %1156 = vmatprep.subr.mxu0 0.0
    %1157 = vmatpush1.msra.mxu0 0.0
    %1158 = vmatprep.subr.mxu0 0.0
    %1159 = vmatpush1.msra.mxu0 0.0
    %1160 = vmatprep.subr.mxu0 0.0
    %1161 = vmatpush1.msra.mxu0 0.0
    %1162 = vmatprep.subr.mxu0 0.0
    %1163 = vmatpush1.msra.mxu0 0.0
    %1164 = vmatprep.subr.mxu0 0.0
    %1165 = vmatpush1.msra.mxu0 0.0
    %1166 = vmatprep.subr.mxu0 0.0
    %1167 = vmatpush1.msra.mxu0 0.0
    %1168 = vmatprep.subr.mxu0 0.0
    %1169 = vmatpush1.msra.mxu0 0.0
    %1170 = vmatprep.subr.mxu0 0.0
    %1171 = vmatpush1.msra.mxu0 0.0
    %1172 = vmatprep.subr.mxu0 0.0
    %1173 = vmatpush1.msra.mxu0 0.0
    %1174 = vmatprep.subr.mxu0 0.0
    %1175 = vmatpush1.msra.mxu0 0.0
    %1176 = vmatprep.subr.mxu0 0.0
    %1177 = vmatpush1.msra.mxu0 0.0
    %1178 = vmatprep.subr.mxu0 0.0
    %1179 = vmatpush1.msra.mxu0 0.0
    %1180 = vmatprep.subr.mxu0 0.0
    %1181 = vmatpush1.msra.mxu0 0.0
    %1182 = vmatprep.mubr.f32.mxu0 0.0
    %1183 = vmatmul.mubr.f32.gmra.mrb[0].mxu0 %v1116
    %v1184 = vpop.f32.mrb[0].mxu0
    %v1185 = vadd.f32 0.0, %v1184
    %v1186 = vpop.f32.mrb[0].mxu0
    %1187 = vdwg.mxu0
    %v1188 = vadd.f32 %v1114, %v1185
    %v1189 = vmax.f32 %v1188, 0.0
    %1190 = vst [vmem:[%s1113] sm:$0xff] %v1189
    %1191 = vmatprep.subr.mxu0 0.0
    %1192 = vmatpush1.msra.mxu0 %v201
    %1193 = vmatprep.subr.mxu0 0.0
    %1194 = vmatpush1.msra.mxu0 %v202
    %1195 = vmatprep.subr.mxu0 0.0
    %1196 = vmatpush1.msra.mxu0 %v203
    %1197 = vmatprep.subr.mxu0 0.0
    %1198 = vmatpush1.msra.mxu0 %v204
    %1199 = vmatprep.subr.mxu0 0.0
    %1200 = vmatpush1.msra.mxu0 %v205
    %1201 = vmatprep.subr.mxu0 0.0
    %1202 = vmatpush1.msra.mxu0 %v206
    %1203 = vmatprep.subr.mxu0 0.0
    %1204 = vmatpush1.msra.mxu0 %v207
    %1205 = vmatprep.subr.mxu0 0.0
    %1206 = vmatpush1.msra.mxu0 %v208
    %1207 = vmatprep.subr.mxu0 0.0
    %1208 = vmatpush1.msra.mxu0 %v209
    %1209 = vmatprep.subr.mxu0 0.0
    %1210 = vmatpush1.msra.mxu0 %v210
    %1211 = vmatprep.subr.mxu0 0.0
    %1212 = vmatpush1.msra.mxu0 %v211
    %1213 = vmatprep.subr.mxu0 0.0
    %1214 = vmatpush1.msra.mxu0 %v212
    %1215 = vmatprep.subr.mxu0 0.0
    %1216 = vmatpush1.msra.mxu0 %v213
    %1217 = vmatprep.subr.mxu0 0.0
    %1218 = vmatpush1.msra.mxu0 %v214
    %1219 = vmatprep.subr.mxu0 0.0
    %1220 = vmatpush1.msra.mxu0 %v215
    %1221 = vmatprep.subr.mxu0 0.0
    %1222 = vmatpush1.msra.mxu0 %v216
    %1223 = vmatprep.subr.mxu0 0.0
    %1224 = vmatpush1.msra.mxu0 0.0
    %1225 = vmatprep.subr.mxu0 0.0
    %1226 = vmatpush1.msra.mxu0 0.0
    %1227 = vmatprep.subr.mxu0 0.0
    %1228 = vmatpush1.msra.mxu0 0.0
    %1229 = vmatprep.subr.mxu0 0.0
    %1230 = vmatpush1.msra.mxu0 0.0
    %1231 = vmatprep.subr.mxu0 0.0
    %1232 = vmatpush1.msra.mxu0 0.0
    %1233 = vmatprep.subr.mxu0 0.0
    %1234 = vmatpush1.msra.mxu0 0.0
    %1235 = vmatprep.subr.mxu0 0.0
    %1236 = vmatpush1.msra.mxu0 0.0
    %1237 = vmatprep.subr.mxu0 0.0
    %1238 = vmatpush1.msra.mxu0 0.0
    %1239 = vmatprep.subr.mxu0 0.0
    %1240 = vmatpush1.msra.mxu0 0.0
    %1241 = vmatprep.subr.mxu0 0.0
    %1242 = vmatpush1.msra.mxu0 0.0
    %1243 = vmatprep.subr.mxu0 0.0
    %1244 = vmatpush1.msra.mxu0 0.0
    %1245 = vmatprep.subr.mxu0 0.0
    %1246 = vmatpush1.msra.mxu0 0.0
    %1247 = vmatprep.subr.mxu0 0.0
    %1248 = vmatpush1.msra.mxu0 0.0
    %1249 = vmatprep.subr.mxu0 0.0
    %1250 = vmatpush1.msra.mxu0 0.0
    %1251 = vmatprep.subr.mxu0 0.0
    %1252 = vmatpush1.msra.mxu0 0.0
    %1253 = vmatprep.subr.mxu0 0.0
    %1254 = vmatpush1.msra.mxu0 0.0
    %1255 = vmatprep.mubr.f32.mxu0 0.0
    %1256 = vmatmul.mubr.f32.gmra.mrb[0].mxu0 %v1189
    %v1257 = vpop.f32.mrb[0].mxu0
    %v1258 = vadd.f32 %v222, %v1257
    %v1259 = vpop.f32.mrb[0].mxu0
    %1260 = vdwg.mxu0
    %s1261 = scalar_lea.vmem [#allocation2], 56
    %v1262 = vld [vmem:[%s1261] sm:$0xff]
    %v1264 = vsel %vm226, %v1258, 0
    %1266 = vmatprep.subr.mxu0 0.0
    %1267 = vmatpush1.msra.mxu0 %v197
    %1268 = vmatprep.subr.mxu0 0.0
    %1269 = vmatpush1.msra.mxu0 %v198
    %1270 = vmatprep.subr.mxu0 0.0
    %1271 = vmatpush1.msra.mxu0 %v199
    %1272 = vmatprep.subr.mxu0 0.0
    %1273 = vmatpush1.msra.mxu0 %v200
    %1274 = vmatprep.subr.mxu0 0.0
    %1275 = vmatpush1.msra.mxu0 0.0
    %1276 = vmatprep.subr.mxu0 0.0
    %1277 = vmatpush1.msra.mxu0 0.0
    %1278 = vmatprep.subr.mxu0 0.0
    %1279 = vmatpush1.msra.mxu0 0.0
    %1280 = vmatprep.subr.mxu0 0.0
    %1281 = vmatpush1.msra.mxu0 0.0
    %1282 = vmatprep.subr.mxu0 0.0
    %1283 = vmatpush1.msra.mxu0 0.0
    %1284 = vmatprep.subr.mxu0 0.0
    %1285 = vmatpush1.msra.mxu0 0.0
    %1286 = vmatprep.subr.mxu0 0.0
    %1287 = vmatpush1.msra.mxu0 0.0
    %1288 = vmatprep.subr.mxu0 0.0
    %1289 = vmatpush1.msra.mxu0 0.0
    %1290 = vmatprep.subr.mxu0 0.0
    %1291 = vmatpush1.msra.mxu0 0.0
    %1292 = vmatprep.subr.mxu0 0.0
    %1293 = vmatpush1.msra.mxu0 0.0
    %1294 = vmatprep.subr.mxu0 0.0
    %1295 = vmatpush1.msra.mxu0 0.0
    %1296 = vmatprep.subr.mxu0 0.0
    %1297 = vmatpush1.msra.mxu0 0.0
    %1298 = vmatprep.subr.mxu0 0.0
    %1299 = vmatpush1.msra.mxu0 0.0
    %1300 = vmatprep.subr.mxu0 0.0
    %1301 = vmatpush1.msra.mxu0 0.0
    %1302 = vmatprep.subr.mxu0 0.0
    %1303 = vmatpush1.msra.mxu0 0.0
    %1304 = vmatprep.subr.mxu0 0.0
    %1305 = vmatpush1.msra.mxu0 0.0
    %1306 = vmatprep.subr.mxu0 0.0
    %1307 = vmatpush1.msra.mxu0 0.0
    %1308 = vmatprep.subr.mxu0 0.0
    %1309 = vmatpush1.msra.mxu0 0.0
    %1310 = vmatprep.subr.mxu0 0.0
    %1311 = vmatpush1.msra.mxu0 0.0
    %1312 = vmatprep.subr.mxu0 0.0
    %1313 = vmatpush1.msra.mxu0 0.0
    %1314 = vmatprep.subr.mxu0 0.0
    %1315 = vmatpush1.msra.mxu0 0.0
    %1316 = vmatprep.subr.mxu0 0.0
    %1317 = vmatpush1.msra.mxu0 0.0
    %1318 = vmatprep.subr.mxu0 0.0
    %1319 = vmatpush1.msra.mxu0 0.0
    %1320 = vmatprep.subr.mxu0 0.0
    %1321 = vmatpush1.msra.mxu0 0.0
    %1322 = vmatprep.subr.mxu0 0.0
    %1323 = vmatpush1.msra.mxu0 0.0
    %1324 = vmatprep.subr.mxu0 0.0
    %1325 = vmatpush1.msra.mxu0 0.0
    %1326 = vmatprep.subr.mxu0 0.0
    %1327 = vmatpush1.msra.mxu0 0.0
    %1328 = vmatprep.subr.mxu0 0.0
    %1329 = vmatpush1.msra.mxu0 0.0
    %1330 = vmatprep.mubr.f32.mxu0 0.0
    %1331 = vmatmul.mubr.f32.gmra.mrb[0].mxu0 %v1264
    %v1332 = vpop.f32.mrb[0].mxu0
    %v1333 = vadd.f32 0.0, %v1332
    %v1334 = vpop.f32.mrb[0].mxu0
    %1335 = vdwg.mxu0
    %v1336 = vadd.f32 %v1262, %v1333
    %v1337 = vmax.f32 %v1336, 0.0
    %1338 = vst [vmem:[%s1261] sm:$0xff] %v1337
    %1339 = vmatprep.subr.mxu0 0.0
    %1340 = vmatpush1.msra.mxu0 %v201
    %1341 = vmatprep.subr.mxu0 0.0
    %1342 = vmatpush1.msra.mxu0 %v202
    %1343 = vmatprep.subr.mxu0 0.0
    %1344 = vmatpush1.msra.mxu0 %v203
    %1345 = vmatprep.subr.mxu0 0.0
    %1346 = vmatpush1.msra.mxu0 %v204
    %1347 = vmatprep.subr.mxu0 0.0
    %1348 = vmatpush1.msra.mxu0 %v205
    %1349 = vmatprep.subr.mxu0 0.0
    %1350 = vmatpush1.msra.mxu0 %v206
    %1351 = vmatprep.subr.mxu0 0.0
    %1352 = vmatpush1.msra.mxu0 %v207
    %1353 = vmatprep.subr.mxu0 0.0
    %1354 = vmatpush1.msra.mxu0 %v208
    %1355 = vmatprep.subr.mxu0 0.0
    %1356 = vmatpush1.msra.mxu0 %v209
    %1357 = vmatprep.subr.mxu0 0.0
    %1358 = vmatpush1.msra.mxu0 %v210
    %1359 = vmatprep.subr.mxu0 0.0
    %1360 = vmatpush1.msra.mxu0 %v211
    %1361 = vmatprep.subr.mxu0 0.0
    %1362 = vmatpush1.msra.mxu0 %v212
    %1363 = vmatprep.subr.mxu0 0.0
    %1364 = vmatpush1.msra.mxu0 %v213
    %1365 = vmatprep.subr.mxu0 0.0
    %1366 = vmatpush1.msra.mxu0 %v214
    %1367 = vmatprep.subr.mxu0 0.0
    %1368 = vmatpush1.msra.mxu0 %v215
    %1369 = vmatprep.subr.mxu0 0.0
    %1370 = vmatpush1.msra.mxu0 %v216
    %1371 = vmatprep.subr.mxu0 0.0
    %1372 = vmatpush1.msra.mxu0 0.0
    %1373 = vmatprep.subr.mxu0 0.0
    %1374 = vmatpush1.msra.mxu0 0.0
    %1375 = vmatprep.subr.mxu0 0.0
    %1376 = vmatpush1.msra.mxu0 0.0
    %1377 = vmatprep.subr.mxu0 0.0
    %1378 = vmatpush1.msra.mxu0 0.0
    %1379 = vmatprep.subr.mxu0 0.0
    %1380 = vmatpush1.msra.mxu0 0.0
    %1381 = vmatprep.subr.mxu0 0.0
    %1382 = vmatpush1.msra.mxu0 0.0
    %1383 = vmatprep.subr.mxu0 0.0
    %1384 = vmatpush1.msra.mxu0 0.0
    %1385 = vmatprep.subr.mxu0 0.0
    %1386 = vmatpush1.msra.mxu0 0.0
    %1387 = vmatprep.subr.mxu0 0.0
    %1388 = vmatpush1.msra.mxu0 0.0
    %1389 = vmatprep.subr.mxu0 0.0
    %1390 = vmatpush1.msra.mxu0 0.0
    %1391 = vmatprep.subr.mxu0 0.0
    %1392 = vmatpush1.msra.mxu0 0.0
    %1393 = vmatprep.subr.mxu0 0.0
    %1394 = vmatpush1.msra.mxu0 0.0
    %1395 = vmatprep.subr.mxu0 0.0
    %1396 = vmatpush1.msra.mxu0 0.0
    %1397 = vmatprep.subr.mxu0 0.0
    %1398 = vmatpush1.msra.mxu0 0.0
    %1399 = vmatprep.subr.mxu0 0.0
    %1400 = vmatpush1.msra.mxu0 0.0
    %1401 = vmatprep.subr.mxu0 0.0
    %1402 = vmatpush1.msra.mxu0 0.0
    %1403 = vmatprep.mubr.f32.mxu0 0.0
    %1404 = vmatmul.mubr.f32.gmra.mrb[0].mxu0 %v1337
    %v1405 = vpop.f32.mrb[0].mxu0
    %v1406 = vadd.f32 %v222, %v1405
    %v1407 = vpop.f32.mrb[0].mxu0
    %1408 = vdwg.mxu0
    %1409 = vst.msk [vmem:[#allocation3] sm:$0xff] %vm226, %v1406
    %v1410 = vld [vmem:[#allocation2] sm:$0xff]
    %v1411 = vld [vmem:[#allocation2 + $0x8] sm:$0xff]
    %v1412 = vld [vmem:[#allocation2 + $0x10] sm:$0xff]
    %v1413 = vld [vmem:[#allocation2 + $0x18] sm:$0xff]
    %v1414 = vld [vmem:[#allocation2 + $0x20] sm:$0xff]
    %v1415 = vld [vmem:[#allocation2 + $0x28] sm:$0xff]
    %v1416 = vld [vmem:[#allocation2 + $0x30] sm:$0xff]
    %v1417 = vld [vmem:[#allocation2 + $0x38] sm:$0xff]
    %v1418 = vld [vmem:[%s7] sm:$0xff]
    %v1419 = vld [vmem:[%s7 + $0x8] sm:$0xff]
    %v1420 = vld [vmem:[%s7 + $0x10] sm:$0xff]
    %v1421 = vld [vmem:[%s7 + $0x18] sm:$0xff]
    %v1422 = vld [vmem:[%s7 + $0x20] sm:$0xff]
    %v1423 = vld [vmem:[%s7 + $0x28] sm:$0xff]
    %v1424 = vld [vmem:[%s7 + $0x30] sm:$0xff]
    %v1425 = vld [vmem:[%s7 + $0x38] sm:$0xff]
    %v1426 = vld [vmem:[%s7 + $0x40] sm:$0xff]
    %v1427 = vld [vmem:[%s7 + $0x48] sm:$0xff]
    %v1428 = vld [vmem:[%s7 + $0x50] sm:$0xff]
    %v1429 = vld [vmem:[%s7 + $0x58] sm:$0xff]
    %v1430 = vld [vmem:[%s7 + $0x60] sm:$0xff]
    %v1431 = vld [vmem:[%s7 + $0x68] sm:$0xff]
    %v1432 = vld [vmem:[%s7 + $0x70] sm:$0xff]
    %v1433 = vld [vmem:[%s7 + $0x78] sm:$0xff]
    %v1434 = vld [vmem:[%s8] sm:$0x1]
    %v1436 = vlaneseq
    %v1437 = vshrl.u32 %v1436, 7
    %v1438 = vsub.s32 0, %v1437
    %v1439 = vrot.slane %v1434, %v1438
    %1441 = vmatprep.subr.mxu0 0.0
    %1442 = vmatpush1.msra.mxu0 %v1418
    %1443 = vmatprep.subr.mxu0 0.0
    %1444 = vmatpush1.msra.mxu0 %v1419
    %1445 = vmatprep.subr.mxu0 0.0
    %1446 = vmatpush1.msra.mxu0 %v1420
    %1447 = vmatprep.subr.mxu0 0.0
    %1448 = vmatpush1.msra.mxu0 %v1421
    %1449 = vmatprep.subr.mxu0 0.0
    %1450 = vmatpush1.msra.mxu0 %v1422
    %1451 = vmatprep.subr.mxu0 0.0
    %1452 = vmatpush1.msra.mxu0 %v1423
    %1453 = vmatprep.subr.mxu0 0.0
    %1454 = vmatpush1.msra.mxu0 %v1424
    %1455 = vmatprep.subr.mxu0 0.0
    %1456 = vmatpush1.msra.mxu0 %v1425
    %1457 = vmatprep.subr.mxu0 0.0
    %1458 = vmatpush1.msra.mxu0 %v1426
    %1459 = vmatprep.subr.mxu0 0.0
    %1460 = vmatpush1.msra.mxu0 %v1427
    %1461 = vmatprep.subr.mxu0 0.0
    %1462 = vmatpush1.msra.mxu0 %v1428
    %1463 = vmatprep.subr.mxu0 0.0
    %1464 = vmatpush1.msra.mxu0 %v1429
    %1465 = vmatprep.subr.mxu0 0.0
    %1466 = vmatpush1.msra.mxu0 %v1430
    %1467 = vmatprep.subr.mxu0 0.0
    %1468 = vmatpush1.msra.mxu0 %v1431
    %1469 = vmatprep.subr.mxu0 0.0
    %1470 = vmatpush1.msra.mxu0 %v1432
    %1471 = vmatprep.subr.mxu0 0.0
    %1472 = vmatpush1.msra.mxu0 %v1433
    %1473 = vmatprep.subr.mxu0 0.0
    %1474 = vmatpush1.msra.mxu0 0.0
    %1475 = vmatprep.subr.mxu0 0.0
    %1476 = vmatpush1.msra.mxu0 0.0
    %1477 = vmatprep.subr.mxu0 0.0
    %1478 = vmatpush1.msra.mxu0 0.0
    %1479 = vmatprep.subr.mxu0 0.0
    %1480 = vmatpush1.msra.mxu0 0.0
    %1481 = vmatprep.subr.mxu0 0.0
    %1482 = vmatpush1.msra.mxu0 0.0
    %1483 = vmatprep.subr.mxu0 0.0
    %1484 = vmatpush1.msra.mxu0 0.0
    %1485 = vmatprep.subr.mxu0 0.0
    %1486 = vmatpush1.msra.mxu0 0.0
    %1487 = vmatprep.subr.mxu0 0.0
    %1488 = vmatpush1.msra.mxu0 0.0
    %1489 = vmatprep.subr.mxu0 0.0
    %1490 = vmatpush1.msra.mxu0 0.0
    %1491 = vmatprep.subr.mxu0 0.0
    %1492 = vmatpush1.msra.mxu0 0.0
    %1493 = vmatprep.subr.mxu0 0.0
    %1494 = vmatpush1.msra.mxu0 0.0
    %1495 = vmatprep.subr.mxu0 0.0
    %1496 = vmatpush1.msra.mxu0 0.0
    %1497 = vmatprep.subr.mxu0 0.0
    %1498 = vmatpush1.msra.mxu0 0.0
    %1499 = vmatprep.subr.mxu0 0.0
    %1500 = vmatpush1.msra.mxu0 0.0
    %1501 = vmatprep.subr.mxu0 0.0
    %1502 = vmatpush1.msra.mxu0 0.0
    %1503 = vmatprep.subr.mxu0 0.0
    %1504 = vmatpush1.msra.mxu0 0.0
    %1505 = vmatprep.mubr.f32.mxu0 0.0
    %1506 = vmatmul.mubr.f32.gmra.mrb[0].mxu0 %v1410
    %v1507 = vpop.f32.mrb[0].mxu0
    %v1508 = vadd.f32 %v1439, %v1507
    %v1509 = vpop.f32.mrb[0].mxu0
    %1510 = vmatprep.mubr.f32.mxu0 0.0
    %1511 = vmatmul.mubr.f32.gmra.mrb[0].mxu0 %v1411
    %v1512 = vpop.f32.mrb[0].mxu0
    %v1513 = vadd.f32 %v1439, %v1512
    %v1514 = vpop.f32.mrb[0].mxu0
    %1515 = vmatprep.mubr.f32.mxu0 0.0
    %1516 = vmatmul.mubr.f32.gmra.mrb[0].mxu0 %v1412
    %v1517 = vpop.f32.mrb[0].mxu0
    %v1518 = vadd.f32 %v1439, %v1517
    %v1519 = vpop.f32.mrb[0].mxu0
    %1520 = vmatprep.mubr.f32.mxu0 0.0
    %1521 = vmatmul.mubr.f32.gmra.mrb[0].mxu0 %v1413
    %v1522 = vpop.f32.mrb[0].mxu0
    %v1523 = vadd.f32 %v1439, %v1522
    %v1524 = vpop.f32.mrb[0].mxu0
    %1525 = vmatprep.mubr.f32.mxu0 0.0
    %1526 = vmatmul.mubr.f32.gmra.mrb[0].mxu0 %v1414
    %v1527 = vpop.f32.mrb[0].mxu0
    %v1528 = vadd.f32 %v1439, %v1527
    %v1529 = vpop.f32.mrb[0].mxu0
    %1530 = vmatprep.mubr.f32.mxu0 0.0
    %1531 = vmatmul.mubr.f32.gmra.mrb[0].mxu0 %v1415
    %v1532 = vpop.f32.mrb[0].mxu0
    %v1533 = vadd.f32 %v1439, %v1532
    %v1534 = vpop.f32.mrb[0].mxu0
    %1535 = vmatprep.mubr.f32.mxu0 0.0
    %1536 = vmatmul.mubr.f32.gmra.mrb[0].mxu0 %v1416
    %v1537 = vpop.f32.mrb[0].mxu0
    %v1538 = vadd.f32 %v1439, %v1537
    %v1539 = vpop.f32.mrb[0].mxu0
    %1540 = vmatprep.mubr.f32.mxu0 0.0
    %1541 = vmatmul.mubr.f32.gmra.mrb[0].mxu0 %v1417
    %v1542 = vpop.f32.mrb[0].mxu0
    %v1543 = vadd.f32 %v1439, %v1542
    %v1544 = vpop.f32.mrb[0].mxu0
    %1545 = vdwg.mxu0
    %v1546 = vsel %vm59, %v1508, -inf
    %1547 = vmax.xlane.f32.xlu0 %v1546
    %v1548 = vpop.xlane.xlu0 %1547
    %v1549 = vsel %vm59, %v1513, -inf
    %1550 = vmax.xlane.f32.xlu0 %v1549
    %v1551 = vpop.xlane.xlu0 %1550
    %v1552 = vsel %vm59, %v1518, -inf
    %1553 = vmax.xlane.f32.xlu0 %v1552
    %v1554 = vpop.xlane.xlu0 %1553
    %v1555 = vsel %vm59, %v1523, -inf
    %1556 = vmax.xlane.f32.xlu0 %v1555
    %v1557 = vpop.xlane.xlu0 %1556
    %v1558 = vsel %vm59, %v1528, -inf
    %1559 = vmax.xlane.f32.xlu0 %v1558
    %v1560 = vpop.xlane.xlu0 %1559
    %v1561 = vsel %vm59, %v1533, -inf
    %1562 = vmax.xlane.f32.xlu0 %v1561
    %v1563 = vpop.xlane.xlu0 %1562
    %v1564 = vsel %vm59, %v1538, -inf
    %1565 = vmax.xlane.f32.xlu0 %v1564
    %v1566 = vpop.xlane.xlu0 %1565
    %v1567 = vsel %vm59, %v1543, -inf
    %1568 = vmax.xlane.f32.xlu0 %v1567
    %v1569 = vpop.xlane.xlu0 %1568
    %v1570 = vsub.f32 %v1508, %v1548
    %v1571 = vsub.f32 %v1513, %v1551
    %v1572 = vsub.f32 %v1518, %v1554
    %v1573 = vsub.f32 %v1523, %v1557
    %v1574 = vsub.f32 %v1528, %v1560
    %v1575 = vsub.f32 %v1533, %v1563
    %v1576 = vsub.f32 %v1538, %v1566
    %v1577 = vsub.f32 %v1543, %v1569
    %v1578 = vmul.f32 %v1570, 1.442695
    %v1579 = vpow.pop %v1578
    %v1580 = vmul.f32 %v1571, 1.442695
    %v1581 = vpow.pop %v1580
    %v1582 = vmul.f32 %v1572, 1.442695
    %v1583 = vpow.pop %v1582
    %v1584 = vmul.f32 %v1573, 1.442695
    %v1585 = vpow.pop %v1584
    %v1586 = vmul.f32 %v1574, 1.442695
    %v1587 = vpow.pop %v1586
    %v1588 = vmul.f32 %v1575, 1.442695
    %v1589 = vpow.pop %v1588
    %v1590 = vmul.f32 %v1576, 1.442695
    %v1591 = vpow.pop %v1590
    %v1592 = vmul.f32 %v1577, 1.442695
    %v1593 = vpow.pop %v1592
    %v1594 = vsel %vm59, %v1579, 0.0
    %1595 = vadd.xlane.f32.xlu0 %v1594
    %v1596 = vpop.xlane.xlu0 %1595
    %v1597 = vsel %vm59, %v1581, 0.0
    %1598 = vadd.xlane.f32.xlu0 %v1597
    %v1599 = vpop.xlane.xlu0 %1598
    %v1600 = vsel %vm59, %v1583, 0.0
    %1601 = vadd.xlane.f32.xlu0 %v1600
    %v1602 = vpop.xlane.xlu0 %1601
    %v1603 = vsel %vm59, %v1585, 0.0
    %1604 = vadd.xlane.f32.xlu0 %v1603
    %v1605 = vpop.xlane.xlu0 %1604
    %v1606 = vsel %vm59, %v1587, 0.0
    %1607 = vadd.xlane.f32.xlu0 %v1606
    %v1608 = vpop.xlane.xlu0 %1607
    %v1609 = vsel %vm59, %v1589, 0.0
    %1610 = vadd.xlane.f32.xlu0 %v1609
    %v1611 = vpop.xlane.xlu0 %1610
    %v1612 = vsel %vm59, %v1591, 0.0
    %1613 = vadd.xlane.f32.xlu0 %v1612
    %v1614 = vpop.xlane.xlu0 %1613
    %v1615 = vsel %vm59, %v1593, 0.0
    %1616 = vadd.xlane.f32.xlu0 %v1615
    %v1617 = vpop.xlane.xlu0 %1616
    %v1618 = vlog2.pop %v1596
    %v1619 = vmul.f32 %v1618, 0.6931472
    %v1620 = vlog2.pop %v1599
    %v1621 = vmul.f32 %v1620, 0.6931472
    %v1622 = vlog2.pop %v1602
    %v1623 = vmul.f32 %v1622, 0.6931472
    %v1624 = vlog2.pop %v1605
    %v1625 = vmul.f32 %v1624, 0.6931472
    %v1626 = vlog2.pop %v1608
    %v1627 = vmul.f32 %v1626, 0.6931472
    %v1628 = vlog2.pop %v1611
    %v1629 = vmul.f32 %v1628, 0.6931472
    %v1630 = vlog2.pop %v1614
    %v1631 = vmul.f32 %v1630, 0.6931472
    %v1632 = vlog2.pop %v1617
    %v1633 = vmul.f32 %v1632, 0.6931472
    %v1634 = vsub.f32 %v1570, %v1619
    %v1635 = vsub.f32 %v1571, %v1621
    %v1636 = vsub.f32 %v1572, %v1623
    %v1637 = vsub.f32 %v1573, %v1625
    %v1638 = vsub.f32 %v1574, %v1627
    %v1639 = vsub.f32 %v1575, %v1629
    %v1640 = vsub.f32 %v1576, %v1631
    %v1641 = vsub.f32 %v1577, %v1633
    %1642 = vst.msk [vmem:[%s9] sm:$0xff] %vm59, %v1634
    %1643 = vst.msk [vmem:[%s9 + $0x8] sm:$0xff] %vm59, %v1635
    %1644 = vst.msk [vmem:[%s9 + $0x10] sm:$0xff] %vm59, %v1636
    %1645 = vst.msk [vmem:[%s9 + $0x18] sm:$0xff] %vm59, %v1637
    %1646 = vst.msk [vmem:[%s9 + $0x20] sm:$0xff] %vm59, %v1638
    %1647 = vst.msk [vmem:[%s9 + $0x28] sm:$0xff] %vm59, %v1639
    %1648 = vst.msk [vmem:[%s9 + $0x30] sm:$0xff] %vm59, %v1640
    %1649 = vst.msk [vmem:[%s9 + $0x38] sm:$0xff] %vm59, %v1641
    // Predicated region
    $region42: #{tpu_custom_call.1} parent=1 // pred_check
      _
    $region43: #{tpu_custom_call.1} parent=1 // pred_check_branch
      %1651 = sbr.rel (0) target = $region45
    $region44: #{tpu_custom_call.1} parent=1 // pred_region
      _
    $region45: #{tpu_custom_call.1} parent=1 // pred_fallthru
      _
    // Predicated region
    $region46: #{tpu_custom_call.1} parent=1 // pred_check
      _
    $region47: #{tpu_custom_call.1} parent=1 // pred_check_branch
      %1653 = sbr.rel (0) target = $region49
    $region48: #{tpu_custom_call.1} parent=1 // pred_region
      %s1655 = ssub.s32 128, 128
      %1656 = vsyncadd [#allocation4], %s1655
      %s1658 = sshll.u32 [#allocation3], 4
      %s1659 = int_to_ptr.vmem [resolvable:$true] %s1658
      %1661 = dma.vmem_to_hbm [thread:$0]  %s1659, 128, %s10, [#allocation4]
    $region49: #{tpu_custom_call.1} parent=1 // pred_fallthru
      _
    // Predicated region
    $region50: #{tpu_custom_call.1} parent=1 // pred_check
      _
    $region51: #{tpu_custom_call.1} parent=1 // pred_check_branch
      %1663 = sbr.rel (0) target = $region53
    $region52: #{tpu_custom_call.1} parent=1 // pred_region
      _
    $region53: #{tpu_custom_call.1} parent=1 // pred_fallthru
      _
    // Predicated region
    $region54: #{tpu_custom_call.1} parent=1 // pred_check
      _
    $region55: #{tpu_custom_call.1} parent=1 // pred_check_branch
      %1665 = sbr.rel (0) target = $region57
    $region56: #{tpu_custom_call.1} parent=1 // pred_region
      %1666 = dma.done [#allocation4], 128
    $region57: #{tpu_custom_call.1} parent=1 // pred_fallthru
      _
    %1667 = vsyncpa [#allocation4], 1

</llo_original>
